<compile_context>
chip_gen: v7x
topology: tpu7x:2x2x1
jax: 0.10.0
libtpu: 0.0.40
codegen_flags: <defaults>
</compile_context>

<pallas_src>
import jax
import jax.numpy as jnp
from jax.experimental import pallas as pl
from jax.experimental.pallas import tpu as pltpu


# ----------------------------------------------------------------------------
# Helpers
# ----------------------------------------------------------------------------
def _round_up(n, m):
    return ((n + m - 1) // m) * m


def _pad_last(a, size):
    pad = size - a.shape[-1]
    if pad == 0:
        return a
    widths = [(0, 0)] * a.ndim
    widths[-1] = (0, pad)
    return jnp.pad(a, widths)


def _pad2(a, rows, cols):
    return jnp.pad(a, ((0, rows - a.shape[0]), (0, cols - a.shape[1])))


# ----------------------------------------------------------------------------
# Pallas kernel: the full RGAT forward (all hops, all relations) in one call.
# ----------------------------------------------------------------------------
def rgat_kernel(x_ref, mb_ref, Wbig_ref, bbig_ref, w2_ref, b2_ref, out_ref):
    # x_ref:    (B, N, Dp)        input node features (hop-0 seed only)
    # mb_ref:   (B, R, N, N) bf16 additive softmax bias (0 / -1e30), resident
    # Wbig_ref: (1, Dp, 3*R*Dp)   bf16 fused projection weights for this hop:
    #                             columns = [Wh_0..Wh_{R-1}, Wu_*, Wv_*]
    # bbig_ref: (1, 1, 3*R*Dp)    f32 fused projection bias (b1 folded into u)
    # w2_ref:   (1, R, Dp)        afcs[2].weight per relation
    # b2_ref:   (hops, R) SMEM    afcs[2].bias per hop/relation
    # out_ref:  (B, N, Dp)        resident output block == activation carrier
    hop = pl.program_id(0)
    B, N, Dp = out_ref.shape
    R = w2_ref.shape[1]

    # Seed the activation carrier from x on the first hop.
    @pl.when(hop == 0)
    def _seed():
        out_ref[...] = x_ref[...]

    xf = out_ref[...].reshape(B * N, Dp)                    # current activations, f32
    xf_bf = xf.astype(jnp.bfloat16)

    # One wide MXU pass: h / u / v for ALL relations at once (lane-fused).
    proj = jnp.dot(xf_bf, Wbig_ref[0],
                   preferred_element_type=jnp.float32) + bbig_ref[0]   # (B*N, 3*R*Dp)

    # Additive mask bias for every relation (binary adjacency semantics;
    # non-binary edge weights are ignored, same as mask_logits on a 0/1 mask).
    mbias = mb_ref[...].astype(jnp.float32)                 # (B, R, N, N)

    acc = jnp.zeros((B, N, Dp), jnp.float32)
    for r in range(R):                                      # static unroll, R is small
        h3 = proj[:, r * Dp:(r + 1) * Dp].reshape(B, N, Dp)
        u3 = proj[:, (R + r) * Dp:(R + r + 1) * Dp].reshape(B, N, Dp)
        v3 = proj[:, (2 * R + r) * Dp:(2 * R + r + 1) * Dp].reshape(B, N, Dp)
        w2 = w2_ref[0, r]                                   # (Dp,)
        b2 = b2_ref[hop, r]                                 # SMEM scalar

        # hidden[b,i,j,:] = relu(h_i @ W1a + h_j @ W1b + b1)   (b1 folded into u3)
        hidden = jnp.maximum(u3[:, :, None, :] + v3[:, None, :, :], 0.0)  # (B,N,N,Dp)
        e = jnp.sum(hidden * w2, axis=-1) + b2                            # (B,N,N)
        e = jnp.where(e > 0.0, e, 0.01 * e)                               # LeakyReLU(0.01)
        logits = e + mbias[:, r]                                          # mask_logits

        # softmax over the FULL flattened N*N logits per batch element (dim=1).
        m = jnp.max(jnp.max(logits, axis=2, keepdims=True), axis=1, keepdims=True)
        p = jnp.exp(logits - m)
        denom = jnp.sum(jnp.sum(p, axis=2, keepdims=True), axis=1, keepdims=True)
        attn = p / denom                                                  # (B,N,N)

        # output_r = attention.bmm(h), accumulated over relations (f32 acc).
        acc = acc + jnp.einsum('bij,bjd->bid',
                               attn.astype(jnp.bfloat16), h3.astype(jnp.bfloat16),
                               preferred_element_type=jnp.float32)

    # x_{hop+1} = relu(sum_r output_r): one lane-dense full-block store per step.
    out_ref[...] = jnp.maximum(acc, 0.0)
    # TODO(synk): F.dropout between hops is identity at inference; omitted.


# ----------------------------------------------------------------------------
# Wrapper
# ----------------------------------------------------------------------------
@jax.jit
def rgat_forward(x, adjs, fused):
    Wbig, bbig, w2s, b2s = fused
    num_hops, Dp, S = Wbig.shape
    B, N, D = x.shape
    R = w2s.shape[1]

    xp = _pad_last(x, Dp)                                   # (B, N, Dp) lane-dense
    # Additive softmax bias in bf16, consumed in the original (B,R,N,N) layout
    # (no HBM transpose of the adjacency).
    mbias = jnp.where(adjs != 0, 0.0, -1e30).astype(jnp.bfloat16)

    out = pl.pallas_call(
        rgat_kernel,
        out_shape=jax.ShapeDtypeStruct((B, N, Dp), jnp.float32),
        grid=(num_hops,),
        in_specs=[
            pl.BlockSpec((B, N, Dp), lambda i: (0, 0, 0)),        # x (hop-0 seed)
            pl.BlockSpec((B, R, N, N), lambda i: (0, 0, 0, 0)),   # mask bias (resident)
            pl.BlockSpec((1, Dp, S), lambda i: (i, 0, 0)),        # fused weights / hop
            pl.BlockSpec((1, 1, S), lambda i: (i, 0, 0)),         # fused bias / hop
            pl.BlockSpec((1, R, Dp), lambda i: (i, 0, 0)),        # w2 / hop
            pl.BlockSpec(memory_space=pltpu.MemorySpace.SMEM),    # b2 (hops, R)
        ],
        out_specs=pl.BlockSpec((B, N, Dp), lambda i: (0, 0, 0)),
        compiler_params=pltpu.CompilerParams(
            dimension_semantics=("arbitrary",),          # hops are sequential
            vmem_limit_bytes=48 * 1024 * 1024),          # cap (tiles here are tiny)
    )(xp, mbias, Wbig, bbig, w2s, b2s)
    return out[..., :D]


# ----------------------------------------------------------------------------
# Parameter packing: fold W into afcs[0] and fuse relations on the lane axis.
# ----------------------------------------------------------------------------
def build_fused_params(all_params, num_hops):
    """all_params[relation][hop] = (W, bW, W1a, W1b, b1, w2, b2) (torch layout)."""
    R = len(all_params)
    D = all_params[0][0][0].shape[0]
    Dp = _round_up(D, 128)
    Wbig_hops, bbig_hops, w2_hops, b2_hops = [], [], [], []
    for i in range(num_hops):
        Wh, Wu, Wv, bh, bu, bv, w2l, b2l = [], [], [], [], [], [], [], []
        for j in range(R):
            W, bW, W1a, W1b, b1, w2, b2 = all_params[j][i]
            assert W1a.shape[1] == D, "att_dim == hidden_size assumed (true for RGAT)"
            Wh.append(_pad2(W, Dp, Dp))                     # h  = x @ W + bW
            Wu.append(_pad2(W @ W1a, Dp, Dp))               # u  = x @ (W@W1a) + (bW@W1a + b1)
            Wv.append(_pad2(W @ W1b, Dp, Dp))               # v  = x @ (W@W1b) +  bW@W1b
            bh.append(_pad_last(bW, Dp))
            bu.append(_pad_last(bW @ W1a + b1, Dp))
            bv.append(_pad_last(bW @ W1b, Dp))
            w2l.append(_pad_last(w2, Dp))
            b2l.append(b2[0, 0])
        Wbig_hops.append(jnp.concatenate(Wh + Wu + Wv, axis=1))   # (Dp, 3*R*Dp)
        bbig_hops.append(jnp.concatenate(bh + bu + bv, axis=1))   # (1, 3*R*Dp)
        w2_hops.append(jnp.concatenate(w2l, axis=0))              # (R, Dp)
        b2_hops.append(jnp.stack(b2l))                            # (R,)
    Wbig = jnp.stack(Wbig_hops).astype(jnp.bfloat16)     # bf16 MXU operand
    bbig = jnp.stack(bbig_hops)[:, None, :].reshape(num_hops, 1, -1).astype(jnp.float32)
    bbig = jnp.stack(bbig_hops).astype(jnp.float32)      # (hops, 1, 3*R*Dp)
    w2s = jnp.stack(w2_hops).astype(jnp.float32)         # (hops, R, Dp)
    b2s = jnp.stack(b2_hops).astype(jnp.float32)         # (hops, R)
    return Wbig, bbig, w2s, b2s


# ----------------------------------------------------------------------------
# Pure-JAX reference (mirrors the torch math exactly, f32).
# ----------------------------------------------------------------------------
def gat_layer_ref(x, adj, params):
    W, bW, W1a, W1b, b1, w2, b2 = params
    B, N, _ = adj.shape
    h = x @ W + bW
    u = h @ W1a
    v = h @ W1b
    hidden = jax.nn.relu(u[:, :, None, :] + v[:, None, :, :] + b1[0])
    e = jnp.sum(hidden * w2[0], axis=-1) + b2[0, 0]
    e = jnp.where(e > 0, e, 0.01 * e)
    masked = e * adj + (1.0 - adj) * (-1e30)              # torch mask_logits
    attn = jax.nn.softmax(masked.reshape(B, -1), axis=1).reshape(B, N, N)
    return attn @ h


def rgat_forward_ref(x, adjs, all_params, num_hops):
    adjs_r = jnp.transpose(adjs, (1, 0, 2, 3))
    R = adjs_r.shape[0]
    for i in range(num_hops):
        outs = [gat_layer_ref(x, adjs_r[j], all_params[j][i]) for j in range(R)]
        x = jax.nn.relu(sum(outs))
    return x


# ----------------------------------------------------------------------------
# Deterministic parameter init (synthetic; shapes follow GATLayer.__init__).
# ----------------------------------------------------------------------------
def init_gat_params(key, D, H):
    ks = jax.random.split(key, 6)
    scale = 1.0 / jnp.sqrt(D)
    W = jax.random.normal(ks[0], (D, D), jnp.float32) * scale        # self.W.weight.T
    bW = jax.random.normal(ks[1], (1, D), jnp.float32) * 0.01        # self.W.bias
    W1 = jax.random.normal(ks[2], (H, 2 * D), jnp.float32) * scale   # afcs[0].weight
    W1a = jnp.transpose(W1[:, :D])                                   # (D, H)
    W1b = jnp.transpose(W1[:, D:])                                   # (D, H)
    b1 = jax.random.normal(ks[3], (1, H), jnp.float32) * 0.01        # afcs[0].bias
    w2 = jax.random.normal(ks[4], (1, H), jnp.float32) * scale       # afcs[2].weight
    b2 = jax.random.normal(ks[5], (1, 1), jnp.float32) * 0.01        # afcs[2].bias
    return (W, bW, W1a, W1b, b1, w2, b2)


if __name__ == "__main__":
    # Small config consistent with the module:
    #   config.hidden_size = 32, config.num_hops = 2, 2 relations, N = 8, B = 2
    B, R, N, D = 2, 2, 8, 32
    num_hops = 2

    key = jax.random.PRNGKey(0)
    k_x, k_adj, k_p = jax.random.split(key, 3)

    x = jax.random.normal(k_x, (B, N, D), jnp.float32)
    adjs = (jax.random.uniform(k_adj, (B, R, N, N)) > 0.5).astype(jnp.float32)
    # ensure every graph has at least its self-loops unmasked
    adjs = jnp.maximum(adjs, jnp.eye(N, dtype=jnp.float32)[None, None, :, :])

    # all_params[relation][hop] -> GATLayer params (torch layout)
    pkeys = jax.random.split(k_p, R * num_hops)
    all_params = [
        [init_gat_params(pkeys[j * num_hops + i], D, D) for i in range(num_hops)]
        for j in range(R)
    ]
    fused = build_fused_params(all_params, num_hops)

    out = jax.block_until_ready(rgat_forward(x, adjs, fused))
    ref = jax.block_until_ready(rgat_forward_ref(x, adjs, all_params, num_hops))

    assert out.shape == (B, N, D)
    # tolerance covers bf16 MXU operands (weights / activations / attn at the dots)
    max_err = jnp.max(jnp.abs(out - ref))
    assert jnp.allclose(out, ref, rtol=6e-2, atol=6e-2), f"max abs err {max_err}"

    print("KERNEL_OK")
</pallas_src>

<mosaic_0001>
module attributes {stable_mosaic.version = 11 : i64} {
  func.func @rgat_kernel(%arg0: i32, %arg1: memref<2x8x128xf32, #tpu.memory_space<vmem>>, %arg2: memref<2x2x8x8xbf16, #tpu.memory_space<vmem>>, %arg3: memref<1x128x768xbf16, #tpu.memory_space<vmem>>, %arg4: memref<1x1x768xf32, #tpu.memory_space<vmem>>, %arg5: memref<1x2x128xf32, #tpu.memory_space<vmem>>, %arg6: memref<2x2xf32, #tpu.memory_space<smem>>, %arg7: memref<2x8x128xf32, #tpu.memory_space<vmem>>) attributes {dimension_semantics = [#tpu.dimension_semantics<arbitrary>], iteration_bounds = array<i64: 2>, scalar_prefetch = 0 : i64, scratch_operands = 0 : i64, tpu.core_type = #tpu.core_type<tc>, window_params = [{pipeline_mode = #tpu.pipeline_mode<synchronous>, transform_indices = @transform_0, window_bounds = array<i64: 2, 8, 128>}, {pipeline_mode = #tpu.pipeline_mode<synchronous>, transform_indices = @transform_1, window_bounds = array<i64: 2, 2, 8, 8>}, {transform_indices = @transform_2, window_bounds = array<i64: 1, 128, 768>}, {transform_indices = @transform_3, window_bounds = array<i64: 1, 1, 768>}, {transform_indices = @transform_4, window_bounds = array<i64: 1, 2, 128>}, {transform_indices = @transform_5, window_bounds = array<i64: 2, 2>}, {pipeline_mode = #tpu.pipeline_mode<synchronous>, transform_indices = @transform_6, window_bounds = array<i64: 2, 8, 128>}]} {
    %c0_i32 = arith.constant 0 : i32
    %0 = arith.cmpi eq, %arg0, %c0_i32 : i32
    %1 = arith.extui %0 : i1 to i32
    %c0_i32_0 = arith.constant 0 : i32
    %2 = arith.cmpi ne, %1, %c0_i32_0 : i32
    scf.if %2 {
      %c0_43 = arith.constant 0 : index
      %c0_44 = arith.constant 0 : index
      %c0_45 = arith.constant 0 : index
      %115 = vector.load %arg1[%c0_43, %c0_44, %c0_45] : memref<2x8x128xf32, #tpu.memory_space<vmem>>, vector<2x8x128xf32>
      %c0_46 = arith.constant 0 : index
      %c0_47 = arith.constant 0 : index
      %c0_48 = arith.constant 0 : index
      %116 = vector.load %arg7[%c0_46, %c0_47, %c0_48] : memref<2x8x128xf32, #tpu.memory_space<vmem>>, vector<2x8x128xf32>
      tpu.vector_store %arg7[%c0_46, %c0_47, %c0_48], %115 {strides = array<i32>} : memref<2x8x128xf32, #tpu.memory_space<vmem>>, vector<2x8x128xf32>,
    } else {
    }
    %c0 = arith.constant 0 : index
    %c0_1 = arith.constant 0 : index
    %c0_2 = arith.constant 0 : index
    %3 = vector.load %arg7[%c0, %c0_1, %c0_2] : memref<2x8x128xf32, #tpu.memory_space<vmem>>, vector<2x8x128xf32>
    %4 = vector.shape_cast %3 : vector<2x8x128xf32> to vector<16x128xf32>
    %5 = arith.truncf %4 : vector<16x128xf32> to vector<16x128xbf16>
    %c0_3 = arith.constant 0 : index
    %c0_4 = arith.constant 0 : index
    %c0_5 = arith.constant 0 : index
    %6 = vector.load %arg3[%c0_3, %c0_4, %c0_5] : memref<1x128x768xbf16, #tpu.memory_space<vmem>>, vector<1x128x768xbf16>
    %7 = vector.shape_cast %6 : vector<1x128x768xbf16> to vector<128x768xbf16>
    %cst = arith.constant dense<0.000000e+00> : vector<16x768xf32>
    %8 = tpu.matmul %5, %7, %cst {dimension_numbers = #tpu.dot_dimension_numbers<[1], [0], [0], [1], [0, 0, 1, 1], [], []>} : vector<16x128xbf16>, vector<128x768xbf16>, vector<16x768xf32> -> vector<16x768xf32>
    %c0_6 = arith.constant 0 : index
    %c0_7 = arith.constant 0 : index
    %c0_8 = arith.constant 0 : index
    %9 = vector.load %arg4[%c0_6, %c0_7, %c0_8] : memref<1x1x768xf32, #tpu.memory_space<vmem>>, vector<1x1x768xf32>
    %10 = vector.shape_cast %9 : vector<1x1x768xf32> to vector<1x768xf32>
    %11 = vector.broadcast %10 : vector<1x768xf32> to vector<16x768xf32>
    %12 = arith.addf %8, %11 : vector<16x768xf32>
    %c0_9 = arith.constant 0 : index
    %c0_10 = arith.constant 0 : index
    %c0_11 = arith.constant 0 : index
    %c0_12 = arith.constant 0 : index
    %13 = vector.load %arg2[%c0_9, %c0_10, %c0_11, %c0_12] : memref<2x2x8x8xbf16, #tpu.memory_space<vmem>>, vector<2x2x8x8xbf16>
    %14 = arith.extf %13 : vector<2x2x8x8xbf16> to vector<2x2x8x8xf32>
    %cst_13 = arith.constant 0.000000e+00 : f32
    %15 = vector.broadcast %cst_13 : f32 to vector<2x8x128xf32>
    %16 = vector.extract_strided_slice %12 {offsets = [0, 0], sizes = [16, 128], strides = [1, 1]} : vector<16x768xf32> to vector<16x128xf32>
    %17 = vector.shape_cast %16 : vector<16x128xf32> to vector<2x8x128xf32>
    %18 = vector.extract_strided_slice %12 {offsets = [0, 256], sizes = [16, 128], strides = [1, 1]} : vector<16x768xf32> to vector<16x128xf32>
    %19 = vector.shape_cast %18 : vector<16x128xf32> to vector<2x8x128xf32>
    %20 = vector.extract_strided_slice %12 {offsets = [0, 512], sizes = [16, 128], strides = [1, 1]} : vector<16x768xf32> to vector<16x128xf32>
    %21 = vector.shape_cast %20 : vector<16x128xf32> to vector<2x8x128xf32>
    %c0_14 = arith.constant 0 : index
    %c0_15 = arith.constant 0 : index
    %c0_16 = arith.constant 0 : index
    %22 = vector.load %arg5[%c0_14, %c0_15, %c0_16] : memref<1x2x128xf32, #tpu.memory_space<vmem>>, vector<1x1x128xf32>
    %23 = vector.shape_cast %22 : vector<1x1x128xf32> to vector<128xf32>
    %24 = arith.index_cast %arg0 : i32 to index
    %c0_17 = arith.constant 0 : index
    %25 = memref.load %arg6[%24, %c0_17] : memref<2x2xf32, #tpu.memory_space<smem>>
    %26 = vector.shape_cast %19 : vector<2x8x128xf32> to vector<2x8x1x128xf32>
    %27 = vector.shape_cast %21 : vector<2x8x128xf32> to vector<2x1x8x128xf32>
    %28 = vector.broadcast %26 : vector<2x8x1x128xf32> to vector<2x8x8x128xf32>
    %29 = vector.broadcast %27 : vector<2x1x8x128xf32> to vector<2x8x8x128xf32>
    %30 = arith.addf %28, %29 : vector<2x8x8x128xf32>
    %cst_18 = arith.constant 0.000000e+00 : f32
    %31 = vector.broadcast %cst_18 : f32 to vector<2x8x8x128xf32>
    %32 = arith.maximumf %30, %31 : vector<2x8x8x128xf32>
    %33 = vector.shape_cast %23 : vector<128xf32> to vector<1x1x1x128xf32>
    %34 = vector.broadcast %33 : vector<1x1x1x128xf32> to vector<2x8x8x128xf32>
    %35 = arith.mulf %32, %34 : vector<2x8x8x128xf32>
    %cst_19 = arith.constant dense<0.000000e+00> : vector<2x8x8xf32>
    %36 = vector.multi_reduction <add>, %35, %cst_19 [3] : vector<2x8x8x128xf32> to vector<2x8x8xf32>
    %37 = vector.broadcast %25 : f32 to vector<2x8x8xf32>
    %38 = arith.addf %36, %37 : vector<2x8x8xf32>
    %cst_20 = arith.constant 0.000000e+00 : f32
    %39 = vector.broadcast %cst_20 : f32 to vector<2x8x8xf32>
    %40 = arith.cmpf ogt, %38, %39 : vector<2x8x8xf32>
    %cst_21 = arith.constant 0.00999999977 : f32
    %41 = vector.broadcast %cst_21 : f32 to vector<2x8x8xf32>
    %42 = arith.mulf %41, %38 : vector<2x8x8xf32>
    %43 = arith.select %40, %38, %42 : vector<2x8x8xi1>, vector<2x8x8xf32>
    %44 = vector.extract_strided_slice %14 {offsets = [0, 0, 0, 0], sizes = [2, 1, 8, 8], strides = [1, 1, 1, 1]} : vector<2x2x8x8xf32> to vector<2x1x8x8xf32>
    %45 = vector.shape_cast %44 : vector<2x1x8x8xf32> to vector<2x8x8xf32>
    %46 = arith.addf %43, %45 : vector<2x8x8xf32>
    %cst_22 = arith.constant dense<0xFF800000> : vector<2x8xf32>
    %47 = vector.multi_reduction <maximumf>, %46, %cst_22 [2] : vector<2x8x8xf32> to vector<2x8xf32>
    %48 = vector.shape_cast %47 : vector<2x8xf32> to vector<2x8x1xf32>
    %cst_23 = arith.constant dense<0xFF800000> : vector<2x1xf32>
    %49 = vector.multi_reduction <maximumf>, %48, %cst_23 [1] : vector<2x8x1xf32> to vector<2x1xf32>
    %50 = vector.shape_cast %49 : vector<2x1xf32> to vector<2x1x1xf32>
    %51 = vector.broadcast %50 : vector<2x1x1xf32> to vector<2x8x8xf32>
    %52 = arith.subf %46, %51 : vector<2x8x8xf32>
    %53 = math.exp %52 : vector<2x8x8xf32>
    %cst_24 = arith.constant dense<0.000000e+00> : vector<2x8xf32>
    %54 = vector.multi_reduction <add>, %53, %cst_24 [2] : vector<2x8x8xf32> to vector<2x8xf32>
    %55 = vector.shape_cast %54 : vector<2x8xf32> to vector<2x8x1xf32>
    %cst_25 = arith.constant dense<0.000000e+00> : vector<2x1xf32>
    %56 = vector.multi_reduction <add>, %55, %cst_25 [1] : vector<2x8x1xf32> to vector<2x1xf32>
    %57 = vector.shape_cast %56 : vector<2x1xf32> to vector<2x1x1xf32>
    %58 = vector.broadcast %57 : vector<2x1x1xf32> to vector<2x8x8xf32>
    %59 = arith.divf %53, %58 : vector<2x8x8xf32>
    %60 = arith.truncf %59 : vector<2x8x8xf32> to vector<2x8x8xbf16>
    %61 = arith.truncf %17 : vector<2x8x128xf32> to vector<2x8x128xbf16>
    "tpu.trace_start"() <{level = 10 : i32, message = "bij,bjd->bid"}> : () -> ()
    %cst_26 = arith.constant dense<0.000000e+00> : vector<2x8x128xf32>
    %62 = tpu.matmul %60, %61, %cst_26 {dimension_numbers = #tpu.dot_dimension_numbers<[2], [1], [1], [2], [0, 0, 0, 1, 1, 2], [0], [0]>} : vector<2x8x8xbf16>, vector<2x8x128xbf16>, vector<2x8x128xf32> -> vector<2x8x128xf32>
    "tpu.trace_stop"() : () -> ()
    %63 = arith.addf %15, %62 : vector<2x8x128xf32>
    %64 = vector.extract_strided_slice %12 {offsets = [0, 128], sizes = [16, 128], strides = [1, 1]} : vector<16x768xf32> to vector<16x128xf32>
    %65 = vector.shape_cast %64 : vector<16x128xf32> to vector<2x8x128xf32>
    %66 = vector.extract_strided_slice %12 {offsets = [0, 384], sizes = [16, 128], strides = [1, 1]} : vector<16x768xf32> to vector<16x128xf32>
    %67 = vector.shape_cast %66 : vector<16x128xf32> to vector<2x8x128xf32>
    %68 = vector.extract_strided_slice %12 {offsets = [0, 640], sizes = [16, 128], strides = [1, 1]} : vector<16x768xf32> to vector<16x128xf32>
    %69 = vector.shape_cast %68 : vector<16x128xf32> to vector<2x8x128xf32>
    %c0_27 = arith.constant 0 : index
    %c1 = arith.constant 1 : index
    %c0_28 = arith.constant 0 : index
    %70 = vector.load %arg5[%c0_27, %c1, %c0_28] : memref<1x2x128xf32, #tpu.memory_space<vmem>>, vector<1x1x128xf32>
    %71 = vector.shape_cast %70 : vector<1x1x128xf32> to vector<128xf32>
    %72 = arith.index_cast %arg0 : i32 to index
    %c1_29 = arith.constant 1 : index
    %73 = memref.load %arg6[%72, %c1_29] : memref<2x2xf32, #tpu.memory_space<smem>>
    %74 = vector.shape_cast %67 : vector<2x8x128xf32> to vector<2x8x1x128xf32>
    %75 = vector.shape_cast %69 : vector<2x8x128xf32> to vector<2x1x8x128xf32>
    %76 = vector.broadcast %74 : vector<2x8x1x128xf32> to vector<2x8x8x128xf32>
    %77 = vector.broadcast %75 : vector<2x1x8x128xf32> to vector<2x8x8x128xf32>
    %78 = arith.addf %76, %77 : vector<2x8x8x128xf32>
    %cst_30 = arith.constant 0.000000e+00 : f32
    %79 = vector.broadcast %cst_30 : f32 to vector<2x8x8x128xf32>
    %80 = arith.maximumf %78, %79 : vector<2x8x8x128xf32>
    %81 = vector.shape_cast %71 : vector<128xf32> to vector<1x1x1x128xf32>
    %82 = vector.broadcast %81 : vector<1x1x1x128xf32> to vector<2x8x8x128xf32>
    %83 = arith.mulf %80, %82 : vector<2x8x8x128xf32>
    %cst_31 = arith.constant dense<0.000000e+00> : vector<2x8x8xf32>
    %84 = vector.multi_reduction <add>, %83, %cst_31 [3] : vector<2x8x8x128xf32> to vector<2x8x8xf32>
    %85 = vector.broadcast %73 : f32 to vector<2x8x8xf32>
    %86 = arith.addf %84, %85 : vector<2x8x8xf32>
    %cst_32 = arith.constant 0.000000e+00 : f32
    %87 = vector.broadcast %cst_32 : f32 to vector<2x8x8xf32>
    %88 = arith.cmpf ogt, %86, %87 : vector<2x8x8xf32>
    %cst_33 = arith.constant 0.00999999977 : f32
    %89 = vector.broadcast %cst_33 : f32 to vector<2x8x8xf32>
    %90 = arith.mulf %89, %86 : vector<2x8x8xf32>
    %91 = arith.select %88, %86, %90 : vector<2x8x8xi1>, vector<2x8x8xf32>
    %92 = vector.extract_strided_slice %14 {offsets = [0, 1, 0, 0], sizes = [2, 1, 8, 8], strides = [1, 1, 1, 1]} : vector<2x2x8x8xf32> to vector<2x1x8x8xf32>
    %93 = vector.shape_cast %92 : vector<2x1x8x8xf32> to vector<2x8x8xf32>
    %94 = arith.addf %91, %93 : vector<2x8x8xf32>
    %cst_34 = arith.constant dense<0xFF800000> : vector<2x8xf32>
    %95 = vector.multi_reduction <maximumf>, %94, %cst_34 [2] : vector<2x8x8xf32> to vector<2x8xf32>
    %96 = vector.shape_cast %95 : vector<2x8xf32> to vector<2x8x1xf32>
    %cst_35 = arith.constant dense<0xFF800000> : vector<2x1xf32>
    %97 = vector.multi_reduction <maximumf>, %96, %cst_35 [1] : vector<2x8x1xf32> to vector<2x1xf32>
    %98 = vector.shape_cast %97 : vector<2x1xf32> to vector<2x1x1xf32>
    %99 = vector.broadcast %98 : vector<2x1x1xf32> to vector<2x8x8xf32>
    %100 = arith.subf %94, %99 : vector<2x8x8xf32>
    %101 = math.exp %100 : vector<2x8x8xf32>
    %cst_36 = arith.constant dense<0.000000e+00> : vector<2x8xf32>
    %102 = vector.multi_reduction <add>, %101, %cst_36 [2] : vector<2x8x8xf32> to vector<2x8xf32>
    %103 = vector.shape_cast %102 : vector<2x8xf32> to vector<2x8x1xf32>
    %cst_37 = arith.constant dense<0.000000e+00> : vector<2x1xf32>
    %104 = vector.multi_reduction <add>, %103, %cst_37 [1] : vector<2x8x1xf32> to vector<2x1xf32>
    %105 = vector.shape_cast %104 : vector<2x1xf32> to vector<2x1x1xf32>
    %106 = vector.broadcast %105 : vector<2x1x1xf32> to vector<2x8x8xf32>
    %107 = arith.divf %101, %106 : vector<2x8x8xf32>
    %108 = arith.truncf %107 : vector<2x8x8xf32> to vector<2x8x8xbf16>
    %109 = arith.truncf %65 : vector<2x8x128xf32> to vector<2x8x128xbf16>
    "tpu.trace_start"() <{level = 10 : i32, message = "bij,bjd->bid"}> : () -> ()
    %cst_38 = arith.constant dense<0.000000e+00> : vector<2x8x128xf32>
    %110 = tpu.matmul %108, %109, %cst_38 {dimension_numbers = #tpu.dot_dimension_numbers<[2], [1], [1], [2], [0, 0, 0, 1, 1, 2], [0], [0]>} : vector<2x8x8xbf16>, vector<2x8x128xbf16>, vector<2x8x128xf32> -> vector<2x8x128xf32>
    "tpu.trace_stop"() : () -> ()
    %111 = arith.addf %63, %110 : vector<2x8x128xf32>
    %cst_39 = arith.constant 0.000000e+00 : f32
    %112 = vector.broadcast %cst_39 : f32 to vector<2x8x128xf32>
    %113 = arith.maximumf %111, %112 : vector<2x8x128xf32>
    %c0_40 = arith.constant 0 : index
    %c0_41 = arith.constant 0 : index
    %c0_42 = arith.constant 0 : index
    %114 = vector.load %arg7[%c0_40, %c0_41, %c0_42] : memref<2x8x128xf32, #tpu.memory_space<vmem>>, vector<2x8x128xf32>
    tpu.vector_store %arg7[%c0_40, %c0_41, %c0_42], %113 {strides = array<i32>} : memref<2x8x128xf32, #tpu.memory_space<vmem>>, vector<2x8x128xf32>,
    return
  }
  func.func @transform_0(%arg0: i32) -> (i32, i32, i32) {
    %c0_i32 = arith.constant 0 : i32
    %c0_i32_0 = arith.constant 0 : i32
    %c0_i32_1 = arith.constant 0 : i32
    %c0_i32_2 = arith.constant 0 : i32
    return %c0_i32, %c0_i32_0, %c0_i32_1 : i32, i32, i32
  }
  func.func @transform_1(%arg0: i32) -> (i32, i32, i32, i32) {
    %c0_i32 = arith.constant 0 : i32
    %c0_i32_0 = arith.constant 0 : i32
    %c0_i32_1 = arith.constant 0 : i32
    %c0_i32_2 = arith.constant 0 : i32
    %c0_i32_3 = arith.constant 0 : i32
    return %c0_i32, %c0_i32_0, %c0_i32_1, %c0_i32_2 : i32, i32, i32, i32
  }
  func.func @transform_2(%arg0: i32) -> (i32, i32, i32) {
    %c0_i32 = arith.constant 0 : i32
    %c0_i32_0 = arith.constant 0 : i32
    %c0_i32_1 = arith.constant 0 : i32
    return %arg0, %c0_i32, %c0_i32_0 : i32, i32, i32
  }
  func.func @transform_3(%arg0: i32) -> (i32, i32, i32) {
    %c0_i32 = arith.constant 0 : i32
    %c0_i32_0 = arith.constant 0 : i32
    %c0_i32_1 = arith.constant 0 : i32
    return %arg0, %c0_i32, %c0_i32_0 : i32, i32, i32
  }
  func.func @transform_4(%arg0: i32) -> (i32, i32, i32) {
    %c0_i32 = arith.constant 0 : i32
    %c0_i32_0 = arith.constant 0 : i32
    %c0_i32_1 = arith.constant 0 : i32
    return %arg0, %c0_i32, %c0_i32_0 : i32, i32, i32
  }
  func.func @transform_5(%arg0: i32) -> (i32, i32) {
    %c0_i32 = arith.constant 0 : i32
    %c0_i32_0 = arith.constant 0 : i32
    %c0_i32_1 = arith.constant 0 : i32
    return %c0_i32, %c0_i32_0 : i32, i32
  }
  func.func @transform_6(%arg0: i32) -> (i32, i32, i32) {
    %c0_i32 = arith.constant 0 : i32
    %c0_i32_0 = arith.constant 0 : i32
    %c0_i32_1 = arith.constant 0 : i32
    %c0_i32_2 = arith.constant 0 : i32
    return %c0_i32, %c0_i32_0, %c0_i32_1 : i32, i32, i32
  }
}

</mosaic_0001>

<llo_original>
// kernel: rgat_forward.1
$region0: #{rgat_forward.1}
  #allocation0 [shape = 'u32[]', space=smem, size = 0x4, offset = 0x4, fixed_abs, tag = 'smem constant byte address 0x4 - core index']
  #allocation1 [shape = 'u32[144,128]{1,0:T(1,128)}', space=vmem, size = 0x12000, scoped, tag = 'internal scratch']
  %s0 = inlined_call_operand.vmem [shape: f32[2,8,128], index: 0, kind: input, shape index: {}]
  %s1 = inlined_call_operand.vmem [shape: bf16[2,2,8,8], index: 1, kind: input, shape index: {}]
  %s2 = inlined_call_operand.hbm [shape: bf16[2,128,768], index: 2, kind: input, shape index: {}]
  %s3 = inlined_call_operand.vmem [shape: f32[2,1,768], index: 3, kind: input, shape index: {}]
  %s4 = inlined_call_operand.vmem [shape: f32[2,2,128], index: 4, kind: input, shape index: {}]
  %s5 = inlined_call_operand.vmem [shape: f32[2,2], index: 5, kind: input, shape index: {}]
  %s6 = inlined_call_operand.hbm [shape: f32[2,8,128], index: 6, kind: output, shape index: {}]
  %s7 = sld [smem:[#allocation0]]
  $region69: #{rgat_forward.1} parent=0
    _
  %s9 = ssub.s32 1, %s7
  %s10 = scalar_select 0, %s9, %s7
  $region1: #{rgat_forward.1} parent=0
    #allocation2 [shape = 'u8[393216]{0}', space=vmem, size = 0x60000, scoped, tag = 'input window, operand 2']
    #allocation3 [shape = 's32[2]{0}', space=sflag, size = 0x8, scoped, tag = 'scoped memory for rgat_forward.1']
    #allocation4 [shape = 's32[2]{0}', space=sflag, size = 0x8, scoped, tag = 'scoped memory for rgat_forward.1']
    #allocation5 [shape = 's32[2]{0}', space=sflag, size = 0x8, scoped, tag = 'scoped memory for rgat_forward.1']
    #allocation6 [shape = 'u8[1024]{0}', space=smem, size = 0x400, scoped, tag = 'input window, operand 5, single buffered']
    #allocation7 [shape = 'u8[8192]{0}', space=vmem, size = 0x2000, scoped, tag = 'output window, operand 0, single buffered']
    %11 = vsyncpa [#allocation3], 0
    %s12 = scalar_lea.sflag [#allocation3], 1
    %13 = vsyncpa %s12, 0
    %14 = vsyncpa [#allocation5], 0
    %15 = vsyncpa [#allocation4], 0
    loop: start=0, step=1, limit=4
    $region2: #{rgat_forward.1} parent=1 // loop_pre_header
      _
    $region3: #{rgat_forward.1} parent=1 // loop_header
      %s17 = sphi 0, %s21
      %p18 = scmp.ge.s32.totalorder %s17, 4
      %s25 = sphi 0, %s25
      %s27 = sphi 0, %s25
      %s28 = sphi 0, %s27
      %s42 = sphi 0, %s28
      %s46 = sphi 0, %s46
      %s48 = sphi 0, %s46
      %s49 = sphi 0, %s48
      %s63 = sphi 0, %s49
      %s69 = sphi 0, %s71
      %s72 = sphi 0, %s69
      %s73 = sphi 0, %s72
      %s89 = sphi 0, %s73
      %s95 = sphi 0, %s97
      %s98 = sphi 0, %s95
      %s99 = sphi 0, %s98
      %s115 = sphi 0, %s99
      %s121 = sphi 0, %s123
      %s124 = sphi 0, %s121
      %s125 = sphi 0, %s124
      %s141 = sphi 0, %s125
      %s145 = sphi 0, %s145
      %s147 = sphi 0, %s145
      %s148 = sphi 0, %s147
      %s162 = sphi 0, %s148
      %s166 = sphi 0, %s166
      %s168 = sphi 0, %s166
      %s169 = sphi 0, %s168
      %s183 = sphi 0, %s169
    $region4: #{rgat_forward.1} parent=1 // loop_header_branch
      %20 = sbr.rel (%p18) target = $region8
    $region5: #{rgat_forward.1} parent=1 // loop_body
      %s22 = ssub.s32 %s17, 1
      %s23 = ssub.s32 %s17, 2
      %s24 = sadd.s32 %s17, 1
      %s26 = sadd.s32 %s25, 1
      %p29 = scmp.eq.s32.totalorder %s17, 1
      %p30 = scmp.ne.s32.totalorder %s25, %s27
      %p31 = scmp.eq.s32.totalorder %s17, 0
      %p32 = por %p30, %p31
      %p33 = scmp.ne.s32.totalorder %s25, %s27
      %p34 = scmp.eq.s32.totalorder %s22, 1
      %p35 = por %p33, %p34
      %p36 = scmp.ne.s32.totalorder %s27, %s28
      %p37 = scmp.eq.s32.totalorder %s22, 0
      %p38 = por %p36, %p37
      %p39 = scmp.ne.s32.totalorder %s27, %s28
      %p40 = scmp.eq.s32.totalorder %s23, 1
      %p41 = por %p39, %p40
      %p43 = scmp.ne.s32.totalorder %s28, %s42
      %p44 = scmp.eq.s32.totalorder %s23, 0
      %p45 = por %p43, %p44
      %s47 = sadd.s32 %s46, 1
      %p50 = scmp.eq.s32.totalorder %s17, 1
      %p51 = scmp.ne.s32.totalorder %s46, %s48
      %p52 = scmp.eq.s32.totalorder %s17, 0
      %p53 = por %p51, %p52
      %p54 = scmp.ne.s32.totalorder %s46, %s48
      %p55 = scmp.eq.s32.totalorder %s22, 1
      %p56 = por %p54, %p55
      %p57 = scmp.ne.s32.totalorder %s48, %s49
      %p58 = scmp.eq.s32.totalorder %s22, 0
      %p59 = por %p57, %p58
      %p60 = scmp.ne.s32.totalorder %s48, %s49
      %p61 = scmp.eq.s32.totalorder %s23, 1
      %p62 = por %p60, %p61
      %p64 = scmp.ne.s32.totalorder %s49, %s63
      %p65 = scmp.eq.s32.totalorder %s23, 0
      %p66 = por %p64, %p65
      %s67 = ssub.s32 %s17, %s24
      %p68 = scmp.eq.s32.totalorder %s67, 0
      %s70 = sadd.s32 %s69, 1
      %s71 = scalar_select %p68, %s69, %s70
      %p74 = pneg %p68
      %p75 = scmp.eq.s32.totalorder %s17, 1
      %p76 = por %p74, %p75
      %p77 = scmp.ne.s32.totalorder %s69, %s72
      %p78 = scmp.eq.s32.totalorder %s17, 0
      %p79 = por %p77, %p78
      %p80 = scmp.ne.s32.totalorder %s69, %s72
      %p81 = scmp.eq.s32.totalorder %s22, 1
      %p82 = por %p80, %p81
      %p83 = scmp.ne.s32.totalorder %s72, %s73
      %p84 = scmp.eq.s32.totalorder %s22, 0
      %p85 = por %p83, %p84
      %p86 = scmp.ne.s32.totalorder %s72, %s73
      %p87 = scmp.eq.s32.totalorder %s23, 1
      %p88 = por %p86, %p87
      %p90 = scmp.ne.s32.totalorder %s73, %s89
      %p91 = scmp.eq.s32.totalorder %s23, 0
      %p92 = por %p90, %p91
      %s93 = ssub.s32 %s17, %s24
      %p94 = scmp.eq.s32.totalorder %s93, 0
      %s96 = sadd.s32 %s95, 1
      %s97 = scalar_select %p94, %s95, %s96
      %p100 = pneg %p94
      %p101 = scmp.eq.s32.totalorder %s17, 1
      %p102 = por %p100, %p101
      %p103 = scmp.ne.s32.totalorder %s95, %s98
      %p104 = scmp.eq.s32.totalorder %s17, 0
      %p105 = por %p103, %p104
      %p106 = scmp.ne.s32.totalorder %s95, %s98
      %p107 = scmp.eq.s32.totalorder %s22, 1
      %p108 = por %p106, %p107
      %p109 = scmp.ne.s32.totalorder %s98, %s99
      %p110 = scmp.eq.s32.totalorder %s22, 0
      %p111 = por %p109, %p110
      %p112 = scmp.ne.s32.totalorder %s98, %s99
      %p113 = scmp.eq.s32.totalorder %s23, 1
      %p114 = por %p112, %p113
      %p116 = scmp.ne.s32.totalorder %s99, %s115
      %p117 = scmp.eq.s32.totalorder %s23, 0
      %p118 = por %p116, %p117
      %s119 = ssub.s32 %s17, %s24
      %p120 = scmp.eq.s32.totalorder %s119, 0
      %s122 = sadd.s32 %s121, 1
      %s123 = scalar_select %p120, %s121, %s122
      %p126 = pneg %p120
      %p127 = scmp.eq.s32.totalorder %s17, 1
      %p128 = por %p126, %p127
      %p129 = scmp.ne.s32.totalorder %s121, %s124
      %p130 = scmp.eq.s32.totalorder %s17, 0
      %p131 = por %p129, %p130
      %p132 = scmp.ne.s32.totalorder %s121, %s124
      %p133 = scmp.eq.s32.totalorder %s22, 1
      %p134 = por %p132, %p133
      %p135 = scmp.ne.s32.totalorder %s124, %s125
      %p136 = scmp.eq.s32.totalorder %s22, 0
      %p137 = por %p135, %p136
      %p138 = scmp.ne.s32.totalorder %s124, %s125
      %p139 = scmp.eq.s32.totalorder %s23, 1
      %p140 = por %p138, %p139
      %p142 = scmp.ne.s32.totalorder %s125, %s141
      %p143 = scmp.eq.s32.totalorder %s23, 0
      %p144 = por %p142, %p143
      %s146 = sadd.s32 %s145, 1
      %p149 = scmp.eq.s32.totalorder %s17, 1
      %p150 = scmp.ne.s32.totalorder %s145, %s147
      %p151 = scmp.eq.s32.totalorder %s17, 0
      %p152 = por %p150, %p151
      %p153 = scmp.ne.s32.totalorder %s145, %s147
      %p154 = scmp.eq.s32.totalorder %s22, 1
      %p155 = por %p153, %p154
      %p156 = scmp.ne.s32.totalorder %s147, %s148
      %p157 = scmp.eq.s32.totalorder %s22, 0
      %p158 = por %p156, %p157
      %p159 = scmp.ne.s32.totalorder %s147, %s148
      %p160 = scmp.eq.s32.totalorder %s23, 1
      %p161 = por %p159, %p160
      %p163 = scmp.ne.s32.totalorder %s148, %s162
      %p164 = scmp.eq.s32.totalorder %s23, 0
      %p165 = por %p163, %p164
      %s167 = sadd.s32 %s166, 1
      %p170 = scmp.eq.s32.totalorder %s17, 1
      %p171 = scmp.ne.s32.totalorder %s166, %s168
      %p172 = scmp.eq.s32.totalorder %s17, 0
      %p173 = por %p171, %p172
      %p174 = scmp.ne.s32.totalorder %s166, %s168
      %p175 = scmp.eq.s32.totalorder %s22, 1
      %p176 = por %p174, %p175
      %p177 = scmp.ne.s32.totalorder %s168, %s169
      %p178 = scmp.eq.s32.totalorder %s22, 0
      %p179 = por %p177, %p178
      %p180 = scmp.ne.s32.totalorder %s168, %s169
      %p181 = scmp.eq.s32.totalorder %s23, 1
      %p182 = por %p180, %p181
      %p184 = scmp.ne.s32.totalorder %s169, %s183
      %p185 = scmp.eq.s32.totalorder %s23, 0
      %p186 = por %p184, %p185
      %p187 = scmp.le.s32.totalorder 1, %s17
      %p188 = scmp.lt.s32.totalorder %s17, 3
      %p189 = pnand %p187, %p188
      %p190 = pneg %p189
      // Predicated region
      $region9: #{rgat_forward.1} parent=5 // pred_check
        _
      $region10: #{rgat_forward.1} parent=5 // pred_check_branch
        %192 = sbr.rel (%p189) target = $region12
      $region11: #{rgat_forward.1} parent=5 // pred_region
        %s193 = ssub.s32 %s17, 1
        // Predicated region
        $region13: #{rgat_forward.1} parent=11 // pred_check
          %p194 = pneg %p38
        $region14: #{rgat_forward.1} parent=11 // pred_check_branch
          %196 = sbr.rel (%p194) target = $region16
        $region15: #{rgat_forward.1} parent=11 // pred_region
          _
        $region16: #{rgat_forward.1} parent=11 // pred_fallthru
          _
        // Predicated region
        $region17: #{rgat_forward.1} parent=11 // pred_check
          %p197 = pneg %p59
        $region18: #{rgat_forward.1} parent=11 // pred_check_branch
          %199 = sbr.rel (%p197) target = $region20
        $region19: #{rgat_forward.1} parent=11 // pred_region
          _
        $region20: #{rgat_forward.1} parent=11 // pred_fallthru
          _
        // Predicated region
        $region21: #{rgat_forward.1} parent=11 // pred_check
          %p200 = pneg %p158
        $region22: #{rgat_forward.1} parent=11 // pred_check_branch
          %202 = sbr.rel (%p200) target = $region24
        $region23: #{rgat_forward.1} parent=11 // pred_region
          %s204 = ssub.s32 32, 32
          %205 = vsyncadd [#allocation5], %s204
          %s207 = sshll.u32 %s5, 4
          %s208 = int_to_ptr.vmem [resolvable:$true] %s207
          %210 = dma.vmem_to_smem %s208, 32, [#allocation6], [#allocation5]
        $region24: #{rgat_forward.1} parent=11 // pred_fallthru
          _
      $region12: #{rgat_forward.1} parent=5 // pred_fallthru
        _
      %p211 = scmp.lt.s32.totalorder %s17, 2
      // Predicated region
      $region25: #{rgat_forward.1} parent=5 // pred_check
        %p212 = pneg %p211
      $region26: #{rgat_forward.1} parent=5 // pred_check_branch
        %214 = sbr.rel (%p212) target = $region28
      $region27: #{rgat_forward.1} parent=5 // pred_region
        // Predicated region
        $region29: #{rgat_forward.1} parent=27 // pred_check
          %p215 = pneg %p79
        $region30: #{rgat_forward.1} parent=27 // pred_check_branch
          %217 = sbr.rel (%p215) target = $region32
        $region31: #{rgat_forward.1} parent=27 // pred_region
          %s218 = sand.u32 %s69, 1
          %s219 = scalar_lea.sflag [#allocation3], %s218
          %s220 = sand.u32 %s69, 1
          %s221 = smul.addr %s220, 384
          %s222 = scalar_lea.vmem [#allocation2], %s221
          %s224 = ssub.s32 6144, 6144
          %225 = vsyncadd %s219, %s224
          %s226 = smul.addr %s17, 96
          %s227 = smul.addr %s226, 64
          %s228 = scalar_lea.hbm %s2, %s227
          %s229 = sshll.u32 %s222, 4
          %s230 = int_to_ptr.vmem [resolvable:$true] %s229
          %235 = dma.hbm_to_vmem [thread:$0]  %s228, 6144, %s230, %s219, 384, 384, 24
        $region32: #{rgat_forward.1} parent=27 // pred_fallthru
          _
        // Predicated region
        $region33: #{rgat_forward.1} parent=27 // pred_check
          %p236 = pneg %p105
        $region34: #{rgat_forward.1} parent=27 // pred_check_branch
          %238 = sbr.rel (%p236) target = $region36
        $region35: #{rgat_forward.1} parent=27 // pred_region
          %p239 = scmp.lt.s32.totalorder %s17, 1
          %s240 = scalar_select %p239, %s17, 1
          %s241 = smul.addr %s240, 6
          %s242 = scalar_lea.vmem %s3, %s241
        $region36: #{rgat_forward.1} parent=27 // pred_fallthru
          _
        // Predicated region
        $region37: #{rgat_forward.1} parent=27 // pred_check
          %p243 = pneg %p131
        $region38: #{rgat_forward.1} parent=27 // pred_check_branch
          %245 = sbr.rel (%p243) target = $region40
        $region39: #{rgat_forward.1} parent=27 // pred_region
          %p246 = scmp.lt.s32.totalorder %s17, 1
          %s247 = scalar_select %p246, %s17, 1
          %s248 = smul.addr %s247, 2
          %s249 = scalar_lea.vmem %s4, %s248
        $region40: #{rgat_forward.1} parent=27 // pred_fallthru
          _
      $region28: #{rgat_forward.1} parent=5 // pred_fallthru
        _
      %p250 = scmp.le.s32.totalorder 1, %s17
      %p251 = scmp.lt.s32.totalorder %s17, 3
      %p252 = pnand %p250, %p251
      %p253 = pneg %p252
      // Predicated region
      $region41: #{rgat_forward.1} parent=5 // pred_check
        _
      $region42: #{rgat_forward.1} parent=5 // pred_check_branch
        %255 = sbr.rel (%p252) target = $region44
      $region43: #{rgat_forward.1} parent=5 // pred_region
        %s256 = ssub.s32 %s17, 1
        %s257 = sand.u32 %s72, 1
        %s258 = scalar_lea.sflag [#allocation3], %s257
        %s259 = sand.u32 %s72, 1
        %s260 = smul.addr %s259, 384
        %s261 = scalar_lea.vmem [#allocation2], %s260
        // Predicated region
        $region45: #{rgat_forward.1} parent=43 // pred_check
          %p262 = pneg %p85
        $region46: #{rgat_forward.1} parent=43 // pred_check_branch
          %264 = sbr.rel (%p262) target = $region48
        $region47: #{rgat_forward.1} parent=43 // pred_region
          %265 = dma.done %s258, 6144
        $region48: #{rgat_forward.1} parent=43 // pred_fallthru
          _
        // Predicated region
        $region49: #{rgat_forward.1} parent=43 // pred_check
          %p266 = pneg %p158
        $region50: #{rgat_forward.1} parent=43 // pred_check_branch
          %268 = sbr.rel (%p266) target = $region52
        $region51: #{rgat_forward.1} parent=43 // pred_region
          %269 = dma.done [#allocation5], 32
        $region52: #{rgat_forward.1} parent=43 // pred_fallthru
          _
        %270 = sfence
        %p271 = pneg %p38
        %p272 = pneg %p35
        %p273 = pneg %p59
        %p274 = pneg %p56
        %s275 = sand.u32 %s72, 1
        %s276 = scalar_lea.sflag [#allocation3], %s275
        %s277 = sand.u32 %s72, 1
        %s278 = smul.addr %s277, 384
        %s279 = scalar_lea.vmem [#allocation2], %s278
        %p280 = pneg %p85
        %p281 = pneg %p82
        %p282 = scmp.lt.s32.totalorder %s22, 1
        %s283 = scalar_select %p282, %s22, 1
        %s284 = smul.addr %s283, 6
        %s285 = scalar_lea.vmem %s3, %s284
        %p286 = pneg %p111
        %p287 = pneg %p108
        %p288 = scmp.lt.s32.totalorder %s22, 1
        %s289 = scalar_select %p288, %s22, 1
        %s290 = smul.addr %s289, 2
        %s291 = scalar_lea.vmem %s4, %s290
        %p292 = pneg %p137
        %p293 = pneg %p134
        %p294 = pneg %p158
        %p295 = pneg %p155
        %p296 = pneg %p179
        %p297 = pneg %p176
        %p298 = scmp.lt.s32.totalorder %s22, 1
        %s299 = scalar_select %p298, %s22, 1
        %s300 = smul.addr %s299, 6
        %s301 = scalar_lea.vmem %s3, %s300
        %p302 = scmp.lt.s32.totalorder %s22, 1
        %s303 = scalar_select %p302, %s22, 1
        %s304 = smul.addr %s303, 2
        %s305 = scalar_lea.vmem %s4, %s304
        %p307 = scmp.eq.s32.totalorder %s22, 0
        // Predicated region
        $region53: #{rgat_forward.1} parent=43 // pred_check
          %p308 = pneg %p307
        $region54: #{rgat_forward.1} parent=43 // pred_check_branch
          %310 = sbr.rel (%p308) target = $region56
        $region55: #{rgat_forward.1} parent=43 // pred_region
          %v311 = vld [vmem:[%s0] sm:$0xff]
          %v312 = vld [vmem:[%s0 + $0x8] sm:$0xff]
          %313 = vst [vmem:[#allocation7] sm:$0xff] %v311
          %314 = vst [vmem:[#allocation7 + $0x8] sm:$0xff] %v312
        $region56: #{rgat_forward.1} parent=43 // pred_fallthru
          _
        %v315 = vld [vmem:[#allocation7] sm:$0xff]
        %v316 = vld [vmem:[#allocation7 + $0x8] sm:$0xff]
        %v317 = vpack.c.bf16 %v316, %v315
        %v318 = vld [vmem:[%s261] sm:$0xff]
        %v319 = vld [vmem:[%s261 + $0x8] sm:$0xff]
        %v320 = vld [vmem:[%s261 + $0x10] sm:$0xff]
        %v321 = vld [vmem:[%s261 + $0x18] sm:$0xff]
        %v322 = vld [vmem:[%s261 + $0x20] sm:$0xff]
        %v323 = vld [vmem:[%s261 + $0x28] sm:$0xff]
        %v324 = vld [vmem:[%s261 + $0x30] sm:$0xff]
        %v325 = vld [vmem:[%s261 + $0x38] sm:$0xff]
        %v326 = vld [vmem:[%s261 + $0x40] sm:$0xff]
        %v327 = vld [vmem:[%s261 + $0x48] sm:$0xff]
        %v328 = vld [vmem:[%s261 + $0x50] sm:$0xff]
        %v329 = vld [vmem:[%s261 + $0x58] sm:$0xff]
        %v330 = vld [vmem:[%s261 + $0x60] sm:$0xff]
        %v331 = vld [vmem:[%s261 + $0x68] sm:$0xff]
        %v332 = vld [vmem:[%s261 + $0x70] sm:$0xff]
        %v333 = vld [vmem:[%s261 + $0x78] sm:$0xff]
        %v334 = vld [vmem:[%s261 + $0x80] sm:$0xff]
        %v335 = vld [vmem:[%s261 + $0x88] sm:$0xff]
        %v336 = vld [vmem:[%s261 + $0x90] sm:$0xff]
        %v337 = vld [vmem:[%s261 + $0x98] sm:$0xff]
        %v338 = vld [vmem:[%s261 + $0xa0] sm:$0xff]
        %v339 = vld [vmem:[%s261 + $0xa8] sm:$0xff]
        %v340 = vld [vmem:[%s261 + $0xb0] sm:$0xff]
        %v341 = vld [vmem:[%s261 + $0xb8] sm:$0xff]
        %v342 = vld [vmem:[%s261 + $0xc0] sm:$0xff]
        %v343 = vld [vmem:[%s261 + $0xc8] sm:$0xff]
        %v344 = vld [vmem:[%s261 + $0xd0] sm:$0xff]
        %v345 = vld [vmem:[%s261 + $0xd8] sm:$0xff]
        %v346 = vld [vmem:[%s261 + $0xe0] sm:$0xff]
        %v347 = vld [vmem:[%s261 + $0xe8] sm:$0xff]
        %v348 = vld [vmem:[%s261 + $0xf0] sm:$0xff]
        %v349 = vld [vmem:[%s261 + $0xf8] sm:$0xff]
        %v350 = vld [vmem:[%s261 + $0x100] sm:$0xff]
        %v351 = vld [vmem:[%s261 + $0x108] sm:$0xff]
        %v352 = vld [vmem:[%s261 + $0x110] sm:$0xff]
        %v353 = vld [vmem:[%s261 + $0x118] sm:$0xff]
        %v354 = vld [vmem:[%s261 + $0x120] sm:$0xff]
        %v355 = vld [vmem:[%s261 + $0x128] sm:$0xff]
        %v356 = vld [vmem:[%s261 + $0x130] sm:$0xff]
        %v357 = vld [vmem:[%s261 + $0x138] sm:$0xff]
        %v358 = vld [vmem:[%s261 + $0x140] sm:$0xff]
        %v359 = vld [vmem:[%s261 + $0x148] sm:$0xff]
        %v360 = vld [vmem:[%s261 + $0x150] sm:$0xff]
        %v361 = vld [vmem:[%s261 + $0x158] sm:$0xff]
        %v362 = vld [vmem:[%s261 + $0x160] sm:$0xff]
        %v363 = vld [vmem:[%s261 + $0x168] sm:$0xff]
        %v364 = vld [vmem:[%s261 + $0x170] sm:$0xff]
        %v365 = vld [vmem:[%s261 + $0x178] sm:$0xff]
        %v366 = vld [vmem:[%s301] sm:$0x3f]
        %v368 = vlaneseq
        %v369 = vshrl.u32 %v368, 7
        %v370 = vsub.s32 0, %v369
        %v371 = vrot.slane %v366, %v370
        %v372 = vlaneseq
        %v373 = vshrl.u32 %v372, 7
        %v374 = vsub.s32 1, %v373
        %v375 = vrot.slane %v366, %v374
        %v376 = vlaneseq
        %v377 = vshrl.u32 %v376, 7
        %v378 = vsub.s32 2, %v377
        %v379 = vrot.slane %v366, %v378
        %v380 = vlaneseq
        %v381 = vshrl.u32 %v380, 7
        %v382 = vsub.s32 3, %v381
        %v383 = vrot.slane %v366, %v382
        %v384 = vlaneseq
        %v385 = vshrl.u32 %v384, 7
        %v386 = vsub.s32 4, %v385
        %v387 = vrot.slane %v366, %v386
        %v388 = vlaneseq
        %v389 = vshrl.u32 %v388, 7
        %v390 = vsub.s32 5, %v389
        %v391 = vrot.slane %v366, %v390
        %v446 = vunpack.c.l.b16 %v318
        %v447 = vunpack.c.h.b16 %v318
        %v448 = vunpack.c.l.b16 %v319
        %v449 = vunpack.c.h.b16 %v319
        %v450 = vunpack.c.l.b16 %v320
        %v451 = vunpack.c.h.b16 %v320
        %v452 = vunpack.c.l.b16 %v321
        %v453 = vunpack.c.h.b16 %v321
        %v454 = vunpack.c.l.b16 %v322
        %v455 = vunpack.c.h.b16 %v322
        %v456 = vunpack.c.l.b16 %v323
        %v457 = vunpack.c.h.b16 %v323
        %v458 = vunpack.c.l.b16 %v324
        %v459 = vunpack.c.h.b16 %v324
        %v460 = vunpack.c.l.b16 %v325
        %v461 = vunpack.c.h.b16 %v325
        %v462 = vunpack.c.l.b16 %v326
        %v463 = vunpack.c.h.b16 %v326
        %v464 = vunpack.c.l.b16 %v327
        %v465 = vunpack.c.h.b16 %v327
        %v466 = vunpack.c.l.b16 %v328
        %v467 = vunpack.c.h.b16 %v328
        %v468 = vunpack.c.l.b16 %v329
        %v469 = vunpack.c.h.b16 %v329
        %v470 = vunpack.c.l.b16 %v330
        %v471 = vunpack.c.h.b16 %v330
        %v472 = vunpack.c.l.b16 %v331
        %v473 = vunpack.c.h.b16 %v331
        %v474 = vunpack.c.l.b16 %v332
        %v475 = vunpack.c.h.b16 %v332
        %v476 = vunpack.c.l.b16 %v333
        %v477 = vunpack.c.h.b16 %v333
        %v478 = vunpack.c.l.b16 %v334
        %v479 = vunpack.c.h.b16 %v334
        %v480 = vunpack.c.l.b16 %v335
        %v481 = vunpack.c.h.b16 %v335
        %v482 = vunpack.c.l.b16 %v336
        %v483 = vunpack.c.h.b16 %v336
        %v484 = vunpack.c.l.b16 %v337
        %v485 = vunpack.c.h.b16 %v337
        %v486 = vunpack.c.l.b16 %v338
        %v487 = vunpack.c.h.b16 %v338
        %v488 = vunpack.c.l.b16 %v339
        %v489 = vunpack.c.h.b16 %v339
        %v490 = vunpack.c.l.b16 %v340
        %v491 = vunpack.c.h.b16 %v340
        %v492 = vunpack.c.l.b16 %v341
        %v493 = vunpack.c.h.b16 %v341
        %v494 = vunpack.c.l.b16 %v342
        %v495 = vunpack.c.h.b16 %v342
        %v496 = vunpack.c.l.b16 %v343
        %v497 = vunpack.c.h.b16 %v343
        %v498 = vunpack.c.l.b16 %v344
        %v499 = vunpack.c.h.b16 %v344
        %v500 = vunpack.c.l.b16 %v345
        %v501 = vunpack.c.h.b16 %v345
        %v502 = vunpack.c.l.b16 %v346
        %v503 = vunpack.c.h.b16 %v346
        %v504 = vunpack.c.l.b16 %v347
        %v505 = vunpack.c.h.b16 %v347
        %v506 = vunpack.c.l.b16 %v348
        %v507 = vunpack.c.h.b16 %v348
        %v508 = vunpack.c.l.b16 %v349
        %v509 = vunpack.c.h.b16 %v349
        %v510 = vunpack.c.l.b16 %v350
        %v511 = vunpack.c.h.b16 %v350
        %v512 = vunpack.c.l.b16 %v351
        %v513 = vunpack.c.h.b16 %v351
        %v514 = vunpack.c.l.b16 %v352
        %v515 = vunpack.c.h.b16 %v352
        %v516 = vunpack.c.l.b16 %v353
        %v517 = vunpack.c.h.b16 %v353
        %v518 = vunpack.c.l.b16 %v354
        %v519 = vunpack.c.h.b16 %v354
        %v520 = vunpack.c.l.b16 %v355
        %v521 = vunpack.c.h.b16 %v355
        %v522 = vunpack.c.l.b16 %v356
        %v523 = vunpack.c.h.b16 %v356
        %v524 = vunpack.c.l.b16 %v357
        %v525 = vunpack.c.h.b16 %v357
        %v526 = vunpack.c.l.b16 %v358
        %v527 = vunpack.c.h.b16 %v358
        %v528 = vunpack.c.l.b16 %v359
        %v529 = vunpack.c.h.b16 %v359
        %v530 = vunpack.c.l.b16 %v360
        %v531 = vunpack.c.h.b16 %v360
        %v532 = vunpack.c.l.b16 %v361
        %v533 = vunpack.c.h.b16 %v361
        %v534 = vunpack.c.l.b16 %v362
        %v535 = vunpack.c.h.b16 %v362
        %v536 = vunpack.c.l.b16 %v363
        %v537 = vunpack.c.h.b16 %v363
        %v538 = vunpack.c.l.b16 %v364
        %v539 = vunpack.c.h.b16 %v364
        %v540 = vunpack.c.l.b16 %v365
        %v541 = vunpack.c.h.b16 %v365
        %v542 = vpack.c.b16 %v452, %v446
        %v543 = vpack.c.b16 %v453, %v447
        %v544 = vpack.c.b16 %v454, %v448
        %v545 = vpack.c.b16 %v455, %v449
        %v546 = vpack.c.b16 %v456, %v450
        %v547 = vpack.c.b16 %v457, %v451
        %v548 = vpack.c.b16 %v464, %v458
        %v549 = vpack.c.b16 %v465, %v459
        %v550 = vpack.c.b16 %v466, %v460
        %v551 = vpack.c.b16 %v467, %v461
        %v552 = vpack.c.b16 %v468, %v462
        %v553 = vpack.c.b16 %v469, %v463
        %v554 = vpack.c.b16 %v476, %v470
        %v555 = vpack.c.b16 %v477, %v471
        %v556 = vpack.c.b16 %v478, %v472
        %v557 = vpack.c.b16 %v479, %v473
        %v558 = vpack.c.b16 %v480, %v474
        %v559 = vpack.c.b16 %v481, %v475
        %v560 = vpack.c.b16 %v488, %v482
        %v561 = vpack.c.b16 %v489, %v483
        %v562 = vpack.c.b16 %v490, %v484
        %v563 = vpack.c.b16 %v491, %v485
        %v564 = vpack.c.b16 %v492, %v486
        %v565 = vpack.c.b16 %v493, %v487
        %v566 = vpack.c.b16 %v500, %v494
        %v567 = vpack.c.b16 %v501, %v495
        %v568 = vpack.c.b16 %v502, %v496
        %v569 = vpack.c.b16 %v503, %v497
        %v570 = vpack.c.b16 %v504, %v498
        %v571 = vpack.c.b16 %v505, %v499
        %v572 = vpack.c.b16 %v512, %v506
        %v573 = vpack.c.b16 %v513, %v507
        %v574 = vpack.c.b16 %v514, %v508
        %v575 = vpack.c.b16 %v515, %v509
        %v576 = vpack.c.b16 %v516, %v510
        %v577 = vpack.c.b16 %v517, %v511
        %v578 = vpack.c.b16 %v524, %v518
        %v579 = vpack.c.b16 %v525, %v519
        %v580 = vpack.c.b16 %v526, %v520
        %v581 = vpack.c.b16 %v527, %v521
        %v582 = vpack.c.b16 %v528, %v522
        %v583 = vpack.c.b16 %v529, %v523
        %v584 = vpack.c.b16 %v536, %v530
        %v585 = vpack.c.b16 %v537, %v531
        %v586 = vpack.c.b16 %v538, %v532
        %v587 = vpack.c.b16 %v539, %v533
        %v588 = vpack.c.b16 %v540, %v534
        %v589 = vpack.c.b16 %v541, %v535
        %638 = vmatprep.subr.bf16.mxu0 %v543
        %639 = vmatpush1.bf16.msra.mxu0 %v542
        %640 = vmatprep.subr.bf16.mxu0 %v549
        %641 = vmatpush1.bf16.msra.mxu0 %v548
        %642 = vmatprep.subr.bf16.mxu0 %v555
        %643 = vmatpush1.bf16.msra.mxu0 %v554
        %644 = vmatprep.subr.bf16.mxu0 %v561
        %645 = vmatpush1.bf16.msra.mxu0 %v560
        %646 = vmatprep.subr.bf16.mxu0 %v567
        %647 = vmatpush1.bf16.msra.mxu0 %v566
        %648 = vmatprep.subr.bf16.mxu0 %v573
        %649 = vmatpush1.bf16.msra.mxu0 %v572
        %650 = vmatprep.subr.bf16.mxu0 %v579
        %651 = vmatpush1.bf16.msra.mxu0 %v578
        %652 = vmatprep.subr.bf16.mxu0 %v585
        %653 = vmatpush1.bf16.msra.mxu0 %v584
        %654 = vmatprep.subr.bf16.mxu0 0
        %655 = vmatpush1.bf16.msra.mxu0 0
        %656 = vmatprep.subr.bf16.mxu0 0
        %657 = vmatpush1.bf16.msra.mxu0 0
        %658 = vmatprep.subr.bf16.mxu0 0
        %659 = vmatpush1.bf16.msra.mxu0 0
        %660 = vmatprep.subr.bf16.mxu0 0
        %661 = vmatpush1.bf16.msra.mxu0 0
        %662 = vmatprep.subr.bf16.mxu0 0
        %663 = vmatpush1.bf16.msra.mxu0 0
        %664 = vmatprep.subr.bf16.mxu0 0
        %665 = vmatpush1.bf16.msra.mxu0 0
        %666 = vmatprep.subr.bf16.mxu0 0
        %667 = vmatpush1.bf16.msra.mxu0 0
        %668 = vmatprep.subr.bf16.mxu0 0
        %669 = vmatpush1.bf16.msra.mxu0 0
        %670 = vmatprep.mubr.bf16.mxu0 0
        %671 = vmatmul.mubr.bf16.gmra.mrb[0].mxu0 %v317
        %v672 = vpop.f32.mrb[0].mxu0
        %v673 = vadd.f32 %v371, %v672
        %v674 = vpop.f32.mrb[0].mxu0
        %v675 = vadd.f32 %v375, %v674
        %v676 = vpop.f32.mrb[0].mxu0
        %v677 = vadd.f32 %v371, %v676
        %v678 = vpop.f32.mrb[0].mxu0
        %v679 = vadd.f32 %v375, %v678
        %680 = vdwg.mxu0
        %681 = vmatprep.subr.bf16.mxu0 %v545
        %682 = vmatpush1.bf16.msra.mxu0 %v544
        %683 = vmatprep.subr.bf16.mxu0 %v551
        %684 = vmatpush1.bf16.msra.mxu0 %v550
        %685 = vmatprep.subr.bf16.mxu0 %v557
        %686 = vmatpush1.bf16.msra.mxu0 %v556
        %687 = vmatprep.subr.bf16.mxu0 %v563
        %688 = vmatpush1.bf16.msra.mxu0 %v562
        %689 = vmatprep.subr.bf16.mxu0 %v569
        %690 = vmatpush1.bf16.msra.mxu0 %v568
        %691 = vmatprep.subr.bf16.mxu0 %v575
        %692 = vmatpush1.bf16.msra.mxu0 %v574
        %693 = vmatprep.subr.bf16.mxu0 %v581
        %694 = vmatpush1.bf16.msra.mxu0 %v580
        %695 = vmatprep.subr.bf16.mxu0 %v587
        %696 = vmatpush1.bf16.msra.mxu0 %v586
        %697 = vmatprep.subr.bf16.mxu0 0
        %698 = vmatpush1.bf16.msra.mxu0 0
        %699 = vmatprep.subr.bf16.mxu0 0
        %700 = vmatpush1.bf16.msra.mxu0 0
        %701 = vmatprep.subr.bf16.mxu0 0
        %702 = vmatpush1.bf16.msra.mxu0 0
        %703 = vmatprep.subr.bf16.mxu0 0
        %704 = vmatpush1.bf16.msra.mxu0 0
        %705 = vmatprep.subr.bf16.mxu0 0
        %706 = vmatpush1.bf16.msra.mxu0 0
        %707 = vmatprep.subr.bf16.mxu0 0
        %708 = vmatpush1.bf16.msra.mxu0 0
        %709 = vmatprep.subr.bf16.mxu0 0
        %710 = vmatpush1.bf16.msra.mxu0 0
        %711 = vmatprep.subr.bf16.mxu0 0
        %712 = vmatpush1.bf16.msra.mxu0 0
        %713 = vmatprep.mubr.bf16.mxu0 0
        %714 = vmatmul.mubr.bf16.gmra.mrb[0].mxu0 %v317
        %v715 = vpop.f32.mrb[0].mxu0
        %v716 = vadd.f32 %v379, %v715
        %v717 = vpop.f32.mrb[0].mxu0
        %v718 = vadd.f32 %v383, %v717
        %v719 = vpop.f32.mrb[0].mxu0
        %v720 = vadd.f32 %v379, %v719
        %v721 = vpop.f32.mrb[0].mxu0
        %v722 = vadd.f32 %v383, %v721
        %723 = vdwg.mxu0
        %724 = vmatprep.subr.bf16.mxu0 %v547
        %725 = vmatpush1.bf16.msra.mxu0 %v546
        %726 = vmatprep.subr.bf16.mxu0 %v553
        %727 = vmatpush1.bf16.msra.mxu0 %v552
        %728 = vmatprep.subr.bf16.mxu0 %v559
        %729 = vmatpush1.bf16.msra.mxu0 %v558
        %730 = vmatprep.subr.bf16.mxu0 %v565
        %731 = vmatpush1.bf16.msra.mxu0 %v564
        %732 = vmatprep.subr.bf16.mxu0 %v571
        %733 = vmatpush1.bf16.msra.mxu0 %v570
        %734 = vmatprep.subr.bf16.mxu0 %v577
        %735 = vmatpush1.bf16.msra.mxu0 %v576
        %736 = vmatprep.subr.bf16.mxu0 %v583
        %737 = vmatpush1.bf16.msra.mxu0 %v582
        %738 = vmatprep.subr.bf16.mxu0 %v589
        %739 = vmatpush1.bf16.msra.mxu0 %v588
        %740 = vmatprep.subr.bf16.mxu0 0
        %741 = vmatpush1.bf16.msra.mxu0 0
        %742 = vmatprep.subr.bf16.mxu0 0
        %743 = vmatpush1.bf16.msra.mxu0 0
        %744 = vmatprep.subr.bf16.mxu0 0
        %745 = vmatpush1.bf16.msra.mxu0 0
        %746 = vmatprep.subr.bf16.mxu0 0
        %747 = vmatpush1.bf16.msra.mxu0 0
        %748 = vmatprep.subr.bf16.mxu0 0
        %749 = vmatpush1.bf16.msra.mxu0 0
        %750 = vmatprep.subr.bf16.mxu0 0
        %751 = vmatpush1.bf16.msra.mxu0 0
        %752 = vmatprep.subr.bf16.mxu0 0
        %753 = vmatpush1.bf16.msra.mxu0 0
        %754 = vmatprep.subr.bf16.mxu0 0
        %755 = vmatpush1.bf16.msra.mxu0 0
        %756 = vmatprep.mubr.bf16.mxu0 0
        %757 = vmatmul.mubr.bf16.gmra.mrb[0].mxu0 %v317
        %v758 = vpop.f32.mrb[0].mxu0
        %v759 = vadd.f32 %v387, %v758
        %v760 = vpop.f32.mrb[0].mxu0
        %v761 = vadd.f32 %v391, %v760
        %v762 = vpop.f32.mrb[0].mxu0
        %v763 = vadd.f32 %v387, %v762
        %v764 = vpop.f32.mrb[0].mxu0
        %v765 = vadd.f32 %v391, %v764
        %766 = vdwg.mxu0
        %v767 = vld [vmem:[%s1] sm:$0xf]
        %v768 = vld [vmem:[%s1 + $0x4] sm:$0xf]
        %v769 = vld [vmem:[%s1 + $0x8] sm:$0xf]
        %v770 = vld [vmem:[%s1 + $0xc] sm:$0xf]
        %v771 = vunpack.c.l.bf16 %v767
        %v772 = vunpack.c.l.bf16 %v768
        %v773 = vunpack.c.l.bf16 %v769
        %v774 = vunpack.c.l.bf16 %v770
        %v775 = vld [vmem:[%s305] sm:$0x1]
        %s776 = smul.u32 %s22, 128
        %s777 = sld [smem:[#allocation6 + %s776]]
        %v780 = vcombine.high %v716, %v716
        %v782 = vunpack.c.l.s4 1966171168
        %v783 = vunpack.c.0.s8 %v782
        %v784 = vlaneseq
        %v785 = vshrl.u32 %v784, 7
        %v786 = vsub.s32 %v783, %v785
        %v787 = vrot.slane %v716, %v786
        %v789 = vunpack.c.l.s4 1966171168
        %v790 = vunpack.c.0.s8 %v789
        %v791 = vlaneseq
        %v792 = vshrl.u32 %v791, 7
        %v793 = vsub.s32 %v790, %v792
        %v794 = vrot.slane %v780, %v793
        %v795 = vcombine.high %v787, %v787
        %v796 = vcombine.high %v794, %v794
        %v798 = vunpack.c.l.s4 1966171168
        %v799 = vunpack.c.0.s8 %v798
        %v800 = vlaneseq
        %v801 = vshrl.u32 %v800, 7
        %v802 = vsub.s32 %v799, %v801
        %v803 = vrot.slane %v787, %v802
        %v805 = vunpack.c.l.s4 1966171168
        %v806 = vunpack.c.0.s8 %v805
        %v807 = vlaneseq
        %v808 = vshrl.u32 %v807, 7
        %v809 = vsub.s32 %v806, %v808
        %v810 = vrot.slane %v794, %v809
        %v812 = vunpack.c.l.s4 1966171168
        %v813 = vunpack.c.0.s8 %v812
        %v814 = vlaneseq
        %v815 = vshrl.u32 %v814, 7
        %v816 = vsub.s32 %v813, %v815
        %v817 = vrot.slane %v795, %v816
        %v819 = vunpack.c.l.s4 1966171168
        %v820 = vunpack.c.0.s8 %v819
        %v821 = vlaneseq
        %v822 = vshrl.u32 %v821, 7
        %v823 = vsub.s32 %v820, %v822
        %v824 = vrot.slane %v796, %v823
        %v825 = vcombine.high %v803, %v803
        %v826 = vcombine.high %v810, %v810
        %v827 = vcombine.high %v817, %v817
        %v828 = vcombine.high %v824, %v824
        %v829 = vcombine.high %v720, %v720
        %v831 = vunpack.c.l.s4 1966171168
        %v832 = vunpack.c.0.s8 %v831
        %v833 = vlaneseq
        %v834 = vshrl.u32 %v833, 7
        %v835 = vsub.s32 %v832, %v834
        %v836 = vrot.slane %v720, %v835
        %v838 = vunpack.c.l.s4 1966171168
        %v839 = vunpack.c.0.s8 %v838
        %v840 = vlaneseq
        %v841 = vshrl.u32 %v840, 7
        %v842 = vsub.s32 %v839, %v841
        %v843 = vrot.slane %v829, %v842
        %v844 = vcombine.high %v836, %v836
        %v845 = vcombine.high %v843, %v843
        %v847 = vunpack.c.l.s4 1966171168
        %v848 = vunpack.c.0.s8 %v847
        %v849 = vlaneseq
        %v850 = vshrl.u32 %v849, 7
        %v851 = vsub.s32 %v848, %v850
        %v852 = vrot.slane %v836, %v851
        %v854 = vunpack.c.l.s4 1966171168
        %v855 = vunpack.c.0.s8 %v854
        %v856 = vlaneseq
        %v857 = vshrl.u32 %v856, 7
        %v858 = vsub.s32 %v855, %v857
        %v859 = vrot.slane %v843, %v858
        %v861 = vunpack.c.l.s4 1966171168
        %v862 = vunpack.c.0.s8 %v861
        %v863 = vlaneseq
        %v864 = vshrl.u32 %v863, 7
        %v865 = vsub.s32 %v862, %v864
        %v866 = vrot.slane %v844, %v865
        %v868 = vunpack.c.l.s4 1966171168
        %v869 = vunpack.c.0.s8 %v868
        %v870 = vlaneseq
        %v871 = vshrl.u32 %v870, 7
        %v872 = vsub.s32 %v869, %v871
        %v873 = vrot.slane %v845, %v872
        %v874 = vcombine.high %v852, %v852
        %v875 = vcombine.high %v859, %v859
        %v876 = vcombine.high %v866, %v866
        %v877 = vcombine.high %v873, %v873
        %v878 = vlaneseq
        %v879 = vshrl.u32 %v878, 7
        %v880 = vsub.s32 0, %v879
        %v881 = vrot.slane %v803, %v880
        %v882 = vlaneseq
        %v883 = vshrl.u32 %v882, 7
        %v884 = vsub.s32 0, %v883
        %v885 = vrot.slane %v817, %v884
        %v886 = vlaneseq
        %v887 = vshrl.u32 %v886, 7
        %v888 = vsub.s32 0, %v887
        %v889 = vrot.slane %v825, %v888
        %v890 = vlaneseq
        %v891 = vshrl.u32 %v890, 7
        %v892 = vsub.s32 0, %v891
        %v893 = vrot.slane %v827, %v892
        %v894 = vlaneseq
        %v895 = vshrl.u32 %v894, 7
        %v896 = vsub.s32 0, %v895
        %v897 = vrot.slane %v810, %v896
        %v898 = vlaneseq
        %v899 = vshrl.u32 %v898, 7
        %v900 = vsub.s32 0, %v899
        %v901 = vrot.slane %v824, %v900
        %v902 = vlaneseq
        %v903 = vshrl.u32 %v902, 7
        %v904 = vsub.s32 0, %v903
        %v905 = vrot.slane %v826, %v904
        %v906 = vlaneseq
        %v907 = vshrl.u32 %v906, 7
        %v908 = vsub.s32 0, %v907
        %v909 = vrot.slane %v828, %v908
        %v910 = vlaneseq
        %v911 = vshrl.u32 %v910, 7
        %v912 = vsub.s32 0, %v911
        %v913 = vrot.slane %v852, %v912
        %v914 = vlaneseq
        %v915 = vshrl.u32 %v914, 7
        %v916 = vsub.s32 0, %v915
        %v917 = vrot.slane %v866, %v916
        %v918 = vlaneseq
        %v919 = vshrl.u32 %v918, 7
        %v920 = vsub.s32 0, %v919
        %v921 = vrot.slane %v874, %v920
        %v922 = vlaneseq
        %v923 = vshrl.u32 %v922, 7
        %v924 = vsub.s32 0, %v923
        %v925 = vrot.slane %v876, %v924
        %v926 = vlaneseq
        %v927 = vshrl.u32 %v926, 7
        %v928 = vsub.s32 0, %v927
        %v929 = vrot.slane %v859, %v928
        %v930 = vlaneseq
        %v931 = vshrl.u32 %v930, 7
        %v932 = vsub.s32 0, %v931
        %v933 = vrot.slane %v873, %v932
        %v934 = vlaneseq
        %v935 = vshrl.u32 %v934, 7
        %v936 = vsub.s32 0, %v935
        %v937 = vrot.slane %v875, %v936
        %v938 = vlaneseq
        %v939 = vshrl.u32 %v938, 7
        %v940 = vsub.s32 0, %v939
        %v941 = vrot.slane %v877, %v940
        %v958 = vadd.f32 %v881, %v759
        %v959 = vadd.f32 %v885, %v759
        %v960 = vadd.f32 %v889, %v759
        %v961 = vadd.f32 %v893, %v759
        %v962 = vadd.f32 %v897, %v759
        %v963 = vadd.f32 %v901, %v759
        %v964 = vadd.f32 %v905, %v759
        %v965 = vadd.f32 %v909, %v759
        %v966 = vadd.f32 %v913, %v763
        %v967 = vadd.f32 %v917, %v763
        %v968 = vadd.f32 %v921, %v763
        %v969 = vadd.f32 %v925, %v763
        %v970 = vadd.f32 %v929, %v763
        %v971 = vadd.f32 %v933, %v763
        %v972 = vadd.f32 %v937, %v763
        %v973 = vadd.f32 %v941, %v763
        %v974 = vmax.f32 %v958, 0.0
        %v975 = vmax.f32 %v959, 0.0
        %v976 = vmax.f32 %v960, 0.0
        %v977 = vmax.f32 %v961, 0.0
        %v978 = vmax.f32 %v962, 0.0
        %v979 = vmax.f32 %v963, 0.0
        %v980 = vmax.f32 %v964, 0.0
        %v981 = vmax.f32 %v965, 0.0
        %v982 = vmax.f32 %v966, 0.0
        %v983 = vmax.f32 %v967, 0.0
        %v984 = vmax.f32 %v968, 0.0
        %v985 = vmax.f32 %v969, 0.0
        %v986 = vmax.f32 %v970, 0.0
        %v987 = vmax.f32 %v971, 0.0
        %v988 = vmax.f32 %v972, 0.0
        %v989 = vmax.f32 %v973, 0.0
        %v990 = vlaneseq
        %v991 = vshrl.u32 %v990, 7
        %v992 = vsub.s32 0, %v991
        %v993 = vrot.slane %v775, %v992
        %v994 = vmul.f32 %v974, %v993
        %v995 = vmul.f32 %v975, %v993
        %v996 = vmul.f32 %v976, %v993
        %v997 = vmul.f32 %v977, %v993
        %v998 = vmul.f32 %v978, %v993
        %v999 = vmul.f32 %v979, %v993
        %v1000 = vmul.f32 %v980, %v993
        %v1001 = vmul.f32 %v981, %v993
        %v1002 = vmul.f32 %v982, %v993
        %v1003 = vmul.f32 %v983, %v993
        %v1004 = vmul.f32 %v984, %v993
        %v1005 = vmul.f32 %v985, %v993
        %v1006 = vmul.f32 %v986, %v993
        %v1007 = vmul.f32 %v987, %v993
        %v1008 = vmul.f32 %v988, %v993
        %v1009 = vmul.f32 %v989, %v993
        %1010 = vadd.xlane.f32.xlu0 %v994
        %v1011 = vpop.xlane.xlu0 %1010
        %1012 = vadd.xlane.f32.xlu0 %v995
        %v1013 = vpop.xlane.xlu0 %1012
        %1014 = vadd.xlane.f32.xlu0 %v996
        %v1015 = vpop.xlane.xlu0 %1014
        %1016 = vadd.xlane.f32.xlu0 %v997
        %v1017 = vpop.xlane.xlu0 %1016
        %1018 = vadd.xlane.f32.xlu0 %v998
        %v1019 = vpop.xlane.xlu0 %1018
        %1020 = vadd.xlane.f32.xlu0 %v999
        %v1021 = vpop.xlane.xlu0 %1020
        %1022 = vadd.xlane.f32.xlu0 %v1000
        %v1023 = vpop.xlane.xlu0 %1022
        %1024 = vadd.xlane.f32.xlu0 %v1001
        %v1025 = vpop.xlane.xlu0 %1024
        %1026 = vadd.xlane.f32.xlu0 %v1002
        %v1027 = vpop.xlane.xlu0 %1026
        %1028 = vadd.xlane.f32.xlu0 %v1003
        %v1029 = vpop.xlane.xlu0 %1028
        %1030 = vadd.xlane.f32.xlu0 %v1004
        %v1031 = vpop.xlane.xlu0 %1030
        %1032 = vadd.xlane.f32.xlu0 %v1005
        %v1033 = vpop.xlane.xlu0 %1032
        %1034 = vadd.xlane.f32.xlu0 %v1006
        %v1035 = vpop.xlane.xlu0 %1034
        %1036 = vadd.xlane.f32.xlu0 %v1007
        %v1037 = vpop.xlane.xlu0 %1036
        %1038 = vadd.xlane.f32.xlu0 %v1008
        %v1039 = vpop.xlane.xlu0 %1038
        %1040 = vadd.xlane.f32.xlu0 %v1009
        %v1041 = vpop.xlane.xlu0 %1040
        %v1042 = vstv %s777
        %v1043 = vadd.f32 %v1011, %v1042
        %v1044 = vadd.f32 %v1013, %v1042
        %v1045 = vadd.f32 %v1015, %v1042
        %v1046 = vadd.f32 %v1017, %v1042
        %v1047 = vadd.f32 %v1019, %v1042
        %v1048 = vadd.f32 %v1021, %v1042
        %v1049 = vadd.f32 %v1023, %v1042
        %v1050 = vadd.f32 %v1025, %v1042
        %v1051 = vadd.f32 %v1027, %v1042
        %v1052 = vadd.f32 %v1029, %v1042
        %v1053 = vadd.f32 %v1031, %v1042
        %v1054 = vadd.f32 %v1033, %v1042
        %v1055 = vadd.f32 %v1035, %v1042
        %v1056 = vadd.f32 %v1037, %v1042
        %v1057 = vadd.f32 %v1039, %v1042
        %v1058 = vadd.f32 %v1041, %v1042
        %vm1059 = vcmp.gt.f32.partialorder %v1043, 0.0
        %vm1060 = vcmp.gt.f32.partialorder %v1044, 0.0
        %vm1061 = vcmp.gt.f32.partialorder %v1045, 0.0
        %vm1062 = vcmp.gt.f32.partialorder %v1046, 0.0
        %vm1063 = vcmp.gt.f32.partialorder %v1047, 0.0
        %vm1064 = vcmp.gt.f32.partialorder %v1048, 0.0
        %vm1065 = vcmp.gt.f32.partialorder %v1049, 0.0
        %vm1066 = vcmp.gt.f32.partialorder %v1050, 0.0
        %vm1067 = vcmp.gt.f32.partialorder %v1051, 0.0
        %vm1068 = vcmp.gt.f32.partialorder %v1052, 0.0
        %vm1069 = vcmp.gt.f32.partialorder %v1053, 0.0
        %vm1070 = vcmp.gt.f32.partialorder %v1054, 0.0
        %vm1071 = vcmp.gt.f32.partialorder %v1055, 0.0
        %vm1072 = vcmp.gt.f32.partialorder %v1056, 0.0
        %vm1073 = vcmp.gt.f32.partialorder %v1057, 0.0
        %vm1074 = vcmp.gt.f32.partialorder %v1058, 0.0
        %v1075 = vmul.f32 %v1043, 0.01
        %v1076 = vmul.f32 %v1044, 0.01
        %v1077 = vmul.f32 %v1045, 0.01
        %v1078 = vmul.f32 %v1046, 0.01
        %v1079 = vmul.f32 %v1047, 0.01
        %v1080 = vmul.f32 %v1048, 0.01
        %v1081 = vmul.f32 %v1049, 0.01
        %v1082 = vmul.f32 %v1050, 0.01
        %v1083 = vmul.f32 %v1051, 0.01
        %v1084 = vmul.f32 %v1052, 0.01
        %v1085 = vmul.f32 %v1053, 0.01
        %v1086 = vmul.f32 %v1054, 0.01
        %v1087 = vmul.f32 %v1055, 0.01
        %v1088 = vmul.f32 %v1056, 0.01
        %v1089 = vmul.f32 %v1057, 0.01
        %v1090 = vmul.f32 %v1058, 0.01
        %v1091 = vsel %vm1059, %v1043, %v1075
        %v1092 = vsel %vm1060, %v1044, %v1076
        %v1093 = vsel %vm1061, %v1045, %v1077
        %v1094 = vsel %vm1062, %v1046, %v1078
        %v1095 = vsel %vm1063, %v1047, %v1079
        %v1096 = vsel %vm1064, %v1048, %v1080
        %v1097 = vsel %vm1065, %v1049, %v1081
        %v1098 = vsel %vm1066, %v1050, %v1082
        %v1099 = vsel %vm1067, %v1051, %v1083
        %v1100 = vsel %vm1068, %v1052, %v1084
        %v1101 = vsel %vm1069, %v1053, %v1085
        %v1102 = vsel %vm1070, %v1054, %v1086
        %v1103 = vsel %vm1071, %v1055, %v1087
        %v1104 = vsel %vm1072, %v1056, %v1088
        %v1105 = vsel %vm1073, %v1057, %v1089
        %v1106 = vsel %vm1074, %v1058, %v1090
        %v1109 = vlaneseq
        %v1110 = vshrl.u32 %v1109, 7
        %v1111 = vsub.s32 0, %v1110
        %v1112 = vrot.slane %v771, %v1111
        %1114 = vbcast.lane.b32.xlu0 %v1112, 256
        %v1115 = vpop.permute.xlu0 %1114
        %v1116 = vlaneseq
        %v1117 = vshrl.u32 %v1116, 7
        %v1118 = vsub.s32 1, %v1117
        %v1119 = vrot.slane %v771, %v1118
        %1121 = vbcast.lane.b32.xlu0 %v1119, 256
        %v1122 = vpop.permute.xlu0 %1121
        %v1123 = vlaneseq
        %v1124 = vshrl.u32 %v1123, 7
        %v1125 = vsub.s32 2, %v1124
        %v1126 = vrot.slane %v771, %v1125
        %1128 = vbcast.lane.b32.xlu0 %v1126, 256
        %v1129 = vpop.permute.xlu0 %1128
        %v1130 = vlaneseq
        %v1131 = vshrl.u32 %v1130, 7
        %v1132 = vsub.s32 3, %v1131
        %v1133 = vrot.slane %v771, %v1132
        %1135 = vbcast.lane.b32.xlu0 %v1133, 256
        %v1136 = vpop.permute.xlu0 %1135
        %v1137 = vlaneseq
        %v1138 = vshrl.u32 %v1137, 7
        %v1139 = vsub.s32 4, %v1138
        %v1140 = vrot.slane %v771, %v1139
        %1142 = vbcast.lane.b32.xlu0 %v1140, 256
        %v1143 = vpop.permute.xlu0 %1142
        %v1144 = vlaneseq
        %v1145 = vshrl.u32 %v1144, 7
        %v1146 = vsub.s32 5, %v1145
        %v1147 = vrot.slane %v771, %v1146
        %1149 = vbcast.lane.b32.xlu0 %v1147, 256
        %v1150 = vpop.permute.xlu0 %1149
        %v1151 = vlaneseq
        %v1152 = vshrl.u32 %v1151, 7
        %v1153 = vsub.s32 6, %v1152
        %v1154 = vrot.slane %v771, %v1153
        %1156 = vbcast.lane.b32.xlu0 %v1154, 256
        %v1157 = vpop.permute.xlu0 %1156
        %v1158 = vlaneseq
        %v1159 = vshrl.u32 %v1158, 7
        %v1160 = vsub.s32 7, %v1159
        %v1161 = vrot.slane %v771, %v1160
        %1163 = vbcast.lane.b32.xlu0 %v1161, 256
        %v1164 = vpop.permute.xlu0 %1163
        %v1165 = vlaneseq
        %v1166 = vshrl.u32 %v1165, 7
        %v1167 = vsub.s32 0, %v1166
        %v1168 = vrot.slane %v773, %v1167
        %1170 = vbcast.lane.b32.xlu0 %v1168, 256
        %v1171 = vpop.permute.xlu0 %1170
        %v1172 = vlaneseq
        %v1173 = vshrl.u32 %v1172, 7
        %v1174 = vsub.s32 1, %v1173
        %v1175 = vrot.slane %v773, %v1174
        %1177 = vbcast.lane.b32.xlu0 %v1175, 256
        %v1178 = vpop.permute.xlu0 %1177
        %v1179 = vlaneseq
        %v1180 = vshrl.u32 %v1179, 7
        %v1181 = vsub.s32 2, %v1180
        %v1182 = vrot.slane %v773, %v1181
        %1184 = vbcast.lane.b32.xlu0 %v1182, 256
        %v1185 = vpop.permute.xlu0 %1184
        %v1186 = vlaneseq
        %v1187 = vshrl.u32 %v1186, 7
        %v1188 = vsub.s32 3, %v1187
        %v1189 = vrot.slane %v773, %v1188
        %1191 = vbcast.lane.b32.xlu0 %v1189, 256
        %v1192 = vpop.permute.xlu0 %1191
        %v1193 = vlaneseq
        %v1194 = vshrl.u32 %v1193, 7
        %v1195 = vsub.s32 4, %v1194
        %v1196 = vrot.slane %v773, %v1195
        %1198 = vbcast.lane.b32.xlu0 %v1196, 256
        %v1199 = vpop.permute.xlu0 %1198
        %v1200 = vlaneseq
        %v1201 = vshrl.u32 %v1200, 7
        %v1202 = vsub.s32 5, %v1201
        %v1203 = vrot.slane %v773, %v1202
        %1205 = vbcast.lane.b32.xlu0 %v1203, 256
        %v1206 = vpop.permute.xlu0 %1205
        %v1207 = vlaneseq
        %v1208 = vshrl.u32 %v1207, 7
        %v1209 = vsub.s32 6, %v1208
        %v1210 = vrot.slane %v773, %v1209
        %1212 = vbcast.lane.b32.xlu0 %v1210, 256
        %v1213 = vpop.permute.xlu0 %1212
        %v1214 = vlaneseq
        %v1215 = vshrl.u32 %v1214, 7
        %v1216 = vsub.s32 7, %v1215
        %v1217 = vrot.slane %v773, %v1216
        %1219 = vbcast.lane.b32.xlu0 %v1217, 256
        %v1220 = vpop.permute.xlu0 %1219
        %v1237 = vadd.f32 %v1091, %v1115
        %v1238 = vadd.f32 %v1092, %v1122
        %v1239 = vadd.f32 %v1093, %v1129
        %v1240 = vadd.f32 %v1094, %v1136
        %v1241 = vadd.f32 %v1095, %v1143
        %v1242 = vadd.f32 %v1096, %v1150
        %v1243 = vadd.f32 %v1097, %v1157
        %v1244 = vadd.f32 %v1098, %v1164
        %v1245 = vadd.f32 %v1099, %v1171
        %v1246 = vadd.f32 %v1100, %v1178
        %v1247 = vadd.f32 %v1101, %v1185
        %v1248 = vadd.f32 %v1102, %v1192
        %v1249 = vadd.f32 %v1103, %v1199
        %v1250 = vadd.f32 %v1104, %v1206
        %v1251 = vadd.f32 %v1105, %v1213
        %v1252 = vadd.f32 %v1106, %v1220
        %1269 = vset.pattern.permute.xlu0 0
        %1270 = vperm.xlu0 %1269, %v1237
        %v1271 = vpop.permute.xlu0 %1270
        %1272 = vset.pattern.permute.xlu0 0
        %1273 = vperm.xlu0 %1272, %v1238
        %v1274 = vpop.permute.xlu0 %1273
        %1275 = vset.pattern.permute.xlu0 0
        %1276 = vperm.xlu0 %1275, %v1239
        %v1277 = vpop.permute.xlu0 %1276
        %1278 = vset.pattern.permute.xlu0 0
        %1279 = vperm.xlu0 %1278, %v1240
        %v1280 = vpop.permute.xlu0 %1279
        %1281 = vset.pattern.permute.xlu0 0
        %1282 = vperm.xlu0 %1281, %v1241
        %v1283 = vpop.permute.xlu0 %1282
        %1284 = vset.pattern.permute.xlu0 0
        %1285 = vperm.xlu0 %1284, %v1242
        %v1286 = vpop.permute.xlu0 %1285
        %1287 = vset.pattern.permute.xlu0 0
        %1288 = vperm.xlu0 %1287, %v1243
        %v1289 = vpop.permute.xlu0 %1288
        %1290 = vset.pattern.permute.xlu0 0
        %1291 = vperm.xlu0 %1290, %v1244
        %v1292 = vpop.permute.xlu0 %1291
        %1293 = vset.pattern.permute.xlu0 0
        %1294 = vperm.xlu0 %1293, %v1245
        %v1295 = vpop.permute.xlu0 %1294
        %1296 = vset.pattern.permute.xlu0 0
        %1297 = vperm.xlu0 %1296, %v1246
        %v1298 = vpop.permute.xlu0 %1297
        %1299 = vset.pattern.permute.xlu0 0
        %1300 = vperm.xlu0 %1299, %v1247
        %v1301 = vpop.permute.xlu0 %1300
        %1302 = vset.pattern.permute.xlu0 0
        %1303 = vperm.xlu0 %1302, %v1248
        %v1304 = vpop.permute.xlu0 %1303
        %1305 = vset.pattern.permute.xlu0 0
        %1306 = vperm.xlu0 %1305, %v1249
        %v1307 = vpop.permute.xlu0 %1306
        %1308 = vset.pattern.permute.xlu0 0
        %1309 = vperm.xlu0 %1308, %v1250
        %v1310 = vpop.permute.xlu0 %1309
        %1311 = vset.pattern.permute.xlu0 0
        %1312 = vperm.xlu0 %1311, %v1251
        %v1313 = vpop.permute.xlu0 %1312
        %1314 = vset.pattern.permute.xlu0 0
        %1315 = vperm.xlu0 %1314, %v1252
        %v1316 = vpop.permute.xlu0 %1315
        %v1317 = vlaneseq
        %v1318 = vand.u32 %v1317, 127
        %v1319 = vlaneseq
        %v1320 = vshrl.u32 %v1319, 7
        %v1321 = vsub.s32 %v1318, %v1320
        %v1322 = vrot.slane %v1271, %v1321
        %v1323 = vlaneseq
        %v1324 = vshrl.u32 %v1323, 7
        %v1325 = vsub.s32 %v1318, %v1324
        %v1326 = vrot.slane %v1274, %v1325
        %v1327 = vlaneseq
        %v1328 = vshrl.u32 %v1327, 7
        %v1329 = vsub.s32 %v1318, %v1328
        %v1330 = vrot.slane %v1277, %v1329
        %v1331 = vlaneseq
        %v1332 = vshrl.u32 %v1331, 7
        %v1333 = vsub.s32 %v1318, %v1332
        %v1334 = vrot.slane %v1280, %v1333
        %v1335 = vlaneseq
        %v1336 = vshrl.u32 %v1335, 7
        %v1337 = vsub.s32 %v1318, %v1336
        %v1338 = vrot.slane %v1283, %v1337
        %v1339 = vlaneseq
        %v1340 = vshrl.u32 %v1339, 7
        %v1341 = vsub.s32 %v1318, %v1340
        %v1342 = vrot.slane %v1286, %v1341
        %v1343 = vlaneseq
        %v1344 = vshrl.u32 %v1343, 7
        %v1345 = vsub.s32 %v1318, %v1344
        %v1346 = vrot.slane %v1289, %v1345
        %v1347 = vlaneseq
        %v1348 = vshrl.u32 %v1347, 7
        %v1349 = vsub.s32 %v1318, %v1348
        %v1350 = vrot.slane %v1292, %v1349
        %v1351 = vlaneseq
        %v1352 = vshrl.u32 %v1351, 7
        %v1353 = vsub.s32 %v1318, %v1352
        %v1354 = vrot.slane %v1295, %v1353
        %v1355 = vlaneseq
        %v1356 = vshrl.u32 %v1355, 7
        %v1357 = vsub.s32 %v1318, %v1356
        %v1358 = vrot.slane %v1298, %v1357
        %v1359 = vlaneseq
        %v1360 = vshrl.u32 %v1359, 7
        %v1361 = vsub.s32 %v1318, %v1360
        %v1362 = vrot.slane %v1301, %v1361
        %v1363 = vlaneseq
        %v1364 = vshrl.u32 %v1363, 7
        %v1365 = vsub.s32 %v1318, %v1364
        %v1366 = vrot.slane %v1304, %v1365
        %v1367 = vlaneseq
        %v1368 = vshrl.u32 %v1367, 7
        %v1369 = vsub.s32 %v1318, %v1368
        %v1370 = vrot.slane %v1307, %v1369
        %v1371 = vlaneseq
        %v1372 = vshrl.u32 %v1371, 7
        %v1373 = vsub.s32 %v1318, %v1372
        %v1374 = vrot.slane %v1310, %v1373
        %v1375 = vlaneseq
        %v1376 = vshrl.u32 %v1375, 7
        %v1377 = vsub.s32 %v1318, %v1376
        %v1378 = vrot.slane %v1313, %v1377
        %v1379 = vlaneseq
        %v1380 = vshrl.u32 %v1379, 7
        %v1381 = vsub.s32 %v1318, %v1380
        %v1382 = vrot.slane %v1316, %v1381
        %vm1383 = vcmask 1041409
        %v1384 = vsel %vm1383, %v1326, %v1322
        %vm1385 = vcmask 1042434
        %v1386 = vsel %vm1385, %v1330, %v1384
        %vm1387 = vcmask 1043459
        %v1388 = vsel %vm1387, %v1334, %v1386
        %vm1389 = vcmask 1044484
        %v1390 = vsel %vm1389, %v1338, %v1388
        %vm1391 = vcmask 1045509
        %v1392 = vsel %vm1391, %v1342, %v1390
        %vm1393 = vcmask 1046534
        %v1394 = vsel %vm1393, %v1346, %v1392
        %vm1395 = vcmask 1047559
        %v1396 = vsel %vm1395, %v1350, %v1394
        %v1397 = vsel %vm1383, %v1358, %v1354
        %v1398 = vsel %vm1385, %v1362, %v1397
        %v1399 = vsel %vm1387, %v1366, %v1398
        %v1400 = vsel %vm1389, %v1370, %v1399
        %v1401 = vsel %vm1391, %v1374, %v1400
        %v1402 = vsel %vm1393, %v1378, %v1401
        %v1403 = vsel %vm1395, %v1382, %v1402
        %vm1406 = vcmask 64512
        %v1407 = vsel %vm1406, %v1396, -inf
        %1408 = vmax.xlane.f32.xlu0 %v1407
        %v1409 = vpop.xlane.xlu0 %1408
        %v1410 = vsel %vm1406, %v1403, -inf
        %1411 = vmax.xlane.f32.xlu0 %v1410
        %v1412 = vpop.xlane.xlu0 %1411
        %v1413 = vrot.slane %v1409, 4
        %v1414 = vmax.f32 %v1409, %v1413
        %v1415 = vrot.slane %v1414, 2
        %v1416 = vmax.f32 %v1414, %v1415
        %v1417 = vrot.slane %v1416, 1
        %v1418 = vmax.f32 %v1416, %v1417
        %v1419 = vrot.slane %v1412, 4
        %v1420 = vmax.f32 %v1412, %v1419
        %v1421 = vrot.slane %v1420, 2
        %v1422 = vmax.f32 %v1420, %v1421
        %v1423 = vrot.slane %v1422, 1
        %v1424 = vmax.f32 %v1422, %v1423
        %v1425 = vsub.f32 %v1237, %v1418
        %v1426 = vsub.f32 %v1238, %v1418
        %v1427 = vsub.f32 %v1239, %v1418
        %v1428 = vsub.f32 %v1240, %v1418
        %v1429 = vsub.f32 %v1241, %v1418
        %v1430 = vsub.f32 %v1242, %v1418
        %v1431 = vsub.f32 %v1243, %v1418
        %v1432 = vsub.f32 %v1244, %v1418
        %v1433 = vsub.f32 %v1245, %v1424
        %v1434 = vsub.f32 %v1246, %v1424
        %v1435 = vsub.f32 %v1247, %v1424
        %v1436 = vsub.f32 %v1248, %v1424
        %v1437 = vsub.f32 %v1249, %v1424
        %v1438 = vsub.f32 %v1250, %v1424
        %v1439 = vsub.f32 %v1251, %v1424
        %v1440 = vsub.f32 %v1252, %v1424
        %v1441 = vmul.f32 %v1425, 1.442695
        %v1442 = vpow.pop %v1441
        %v1443 = vmul.f32 %v1426, 1.442695
        %v1444 = vpow.pop %v1443
        %v1445 = vmul.f32 %v1427, 1.442695
        %v1446 = vpow.pop %v1445
        %v1447 = vmul.f32 %v1428, 1.442695
        %v1448 = vpow.pop %v1447
        %v1449 = vmul.f32 %v1429, 1.442695
        %v1450 = vpow.pop %v1449
        %v1451 = vmul.f32 %v1430, 1.442695
        %v1452 = vpow.pop %v1451
        %v1453 = vmul.f32 %v1431, 1.442695
        %v1454 = vpow.pop %v1453
        %v1455 = vmul.f32 %v1432, 1.442695
        %v1456 = vpow.pop %v1455
        %v1457 = vmul.f32 %v1433, 1.442695
        %v1458 = vpow.pop %v1457
        %v1459 = vmul.f32 %v1434, 1.442695
        %v1460 = vpow.pop %v1459
        %v1461 = vmul.f32 %v1435, 1.442695
        %v1462 = vpow.pop %v1461
        %v1463 = vmul.f32 %v1436, 1.442695
        %v1464 = vpow.pop %v1463
        %v1465 = vmul.f32 %v1437, 1.442695
        %v1466 = vpow.pop %v1465
        %v1467 = vmul.f32 %v1438, 1.442695
        %v1468 = vpow.pop %v1467
        %v1469 = vmul.f32 %v1439, 1.442695
        %v1470 = vpow.pop %v1469
        %v1471 = vmul.f32 %v1440, 1.442695
        %v1472 = vpow.pop %v1471
        %1489 = vset.pattern.permute.xlu0 0
        %1490 = vperm.xlu0 %1489, %v1442
        %v1491 = vpop.permute.xlu0 %1490
        %1492 = vset.pattern.permute.xlu0 0
        %1493 = vperm.xlu0 %1492, %v1444
        %v1494 = vpop.permute.xlu0 %1493
        %1495 = vset.pattern.permute.xlu0 0
        %1496 = vperm.xlu0 %1495, %v1446
        %v1497 = vpop.permute.xlu0 %1496
        %1498 = vset.pattern.permute.xlu0 0
        %1499 = vperm.xlu0 %1498, %v1448
        %v1500 = vpop.permute.xlu0 %1499
        %1501 = vset.pattern.permute.xlu0 0
        %1502 = vperm.xlu0 %1501, %v1450
        %v1503 = vpop.permute.xlu0 %1502
        %1504 = vset.pattern.permute.xlu0 0
        %1505 = vperm.xlu0 %1504, %v1452
        %v1506 = vpop.permute.xlu0 %1505
        %1507 = vset.pattern.permute.xlu0 0
        %1508 = vperm.xlu0 %1507, %v1454
        %v1509 = vpop.permute.xlu0 %1508
        %1510 = vset.pattern.permute.xlu0 0
        %1511 = vperm.xlu0 %1510, %v1456
        %v1512 = vpop.permute.xlu0 %1511
        %1513 = vset.pattern.permute.xlu0 0
        %1514 = vperm.xlu0 %1513, %v1458
        %v1515 = vpop.permute.xlu0 %1514
        %1516 = vset.pattern.permute.xlu0 0
        %1517 = vperm.xlu0 %1516, %v1460
        %v1518 = vpop.permute.xlu0 %1517
        %1519 = vset.pattern.permute.xlu0 0
        %1520 = vperm.xlu0 %1519, %v1462
        %v1521 = vpop.permute.xlu0 %1520
        %1522 = vset.pattern.permute.xlu0 0
        %1523 = vperm.xlu0 %1522, %v1464
        %v1524 = vpop.permute.xlu0 %1523
        %1525 = vset.pattern.permute.xlu0 0
        %1526 = vperm.xlu0 %1525, %v1466
        %v1527 = vpop.permute.xlu0 %1526
        %1528 = vset.pattern.permute.xlu0 0
        %1529 = vperm.xlu0 %1528, %v1468
        %v1530 = vpop.permute.xlu0 %1529
        %1531 = vset.pattern.permute.xlu0 0
        %1532 = vperm.xlu0 %1531, %v1470
        %v1533 = vpop.permute.xlu0 %1532
        %1534 = vset.pattern.permute.xlu0 0
        %1535 = vperm.xlu0 %1534, %v1472
        %v1536 = vpop.permute.xlu0 %1535
        %v1537 = vlaneseq
        %v1538 = vshrl.u32 %v1537, 7
        %v1539 = vsub.s32 %v1318, %v1538
        %v1540 = vrot.slane %v1491, %v1539
        %v1541 = vlaneseq
        %v1542 = vshrl.u32 %v1541, 7
        %v1543 = vsub.s32 %v1318, %v1542
        %v1544 = vrot.slane %v1494, %v1543
        %v1545 = vlaneseq
        %v1546 = vshrl.u32 %v1545, 7
        %v1547 = vsub.s32 %v1318, %v1546
        %v1548 = vrot.slane %v1497, %v1547
        %v1549 = vlaneseq
        %v1550 = vshrl.u32 %v1549, 7
        %v1551 = vsub.s32 %v1318, %v1550
        %v1552 = vrot.slane %v1500, %v1551
        %v1553 = vlaneseq
        %v1554 = vshrl.u32 %v1553, 7
        %v1555 = vsub.s32 %v1318, %v1554
        %v1556 = vrot.slane %v1503, %v1555
        %v1557 = vlaneseq
        %v1558 = vshrl.u32 %v1557, 7
        %v1559 = vsub.s32 %v1318, %v1558
        %v1560 = vrot.slane %v1506, %v1559
        %v1561 = vlaneseq
        %v1562 = vshrl.u32 %v1561, 7
        %v1563 = vsub.s32 %v1318, %v1562
        %v1564 = vrot.slane %v1509, %v1563
        %v1565 = vlaneseq
        %v1566 = vshrl.u32 %v1565, 7
        %v1567 = vsub.s32 %v1318, %v1566
        %v1568 = vrot.slane %v1512, %v1567
        %v1569 = vlaneseq
        %v1570 = vshrl.u32 %v1569, 7
        %v1571 = vsub.s32 %v1318, %v1570
        %v1572 = vrot.slane %v1515, %v1571
        %v1573 = vlaneseq
        %v1574 = vshrl.u32 %v1573, 7
        %v1575 = vsub.s32 %v1318, %v1574
        %v1576 = vrot.slane %v1518, %v1575
        %v1577 = vlaneseq
        %v1578 = vshrl.u32 %v1577, 7
        %v1579 = vsub.s32 %v1318, %v1578
        %v1580 = vrot.slane %v1521, %v1579
        %v1581 = vlaneseq
        %v1582 = vshrl.u32 %v1581, 7
        %v1583 = vsub.s32 %v1318, %v1582
        %v1584 = vrot.slane %v1524, %v1583
        %v1585 = vlaneseq
        %v1586 = vshrl.u32 %v1585, 7
        %v1587 = vsub.s32 %v1318, %v1586
        %v1588 = vrot.slane %v1527, %v1587
        %v1589 = vlaneseq
        %v1590 = vshrl.u32 %v1589, 7
        %v1591 = vsub.s32 %v1318, %v1590
        %v1592 = vrot.slane %v1530, %v1591
        %v1593 = vlaneseq
        %v1594 = vshrl.u32 %v1593, 7
        %v1595 = vsub.s32 %v1318, %v1594
        %v1596 = vrot.slane %v1533, %v1595
        %v1597 = vlaneseq
        %v1598 = vshrl.u32 %v1597, 7
        %v1599 = vsub.s32 %v1318, %v1598
        %v1600 = vrot.slane %v1536, %v1599
        %v1601 = vsel %vm1383, %v1544, %v1540
        %v1602 = vsel %vm1385, %v1548, %v1601
        %v1603 = vsel %vm1387, %v1552, %v1602
        %v1604 = vsel %vm1389, %v1556, %v1603
        %v1605 = vsel %vm1391, %v1560, %v1604
        %v1606 = vsel %vm1393, %v1564, %v1605
        %v1607 = vsel %vm1395, %v1568, %v1606
        %v1608 = vsel %vm1383, %v1576, %v1572
        %v1609 = vsel %vm1385, %v1580, %v1608
        %v1610 = vsel %vm1387, %v1584, %v1609
        %v1611 = vsel %vm1389, %v1588, %v1610
        %v1612 = vsel %vm1391, %v1592, %v1611
        %v1613 = vsel %vm1393, %v1596, %v1612
        %v1614 = vsel %vm1395, %v1600, %v1613
        %v1617 = vsel %vm1406, %v1607, 0.0
        %1618 = vadd.xlane.f32.xlu0 %v1617
        %v1619 = vpop.xlane.xlu0 %1618
        %v1620 = vsel %vm1406, %v1614, 0.0
        %1621 = vadd.xlane.f32.xlu0 %v1620
        %v1622 = vpop.xlane.xlu0 %1621
        %v1623 = vrot.slane %v1619, 4
        %v1624 = vadd.f32 %v1619, %v1623
        %v1625 = vrot.slane %v1624, 2
        %v1626 = vadd.f32 %v1624, %v1625
        %v1627 = vrot.slane %v1626, 1
        %v1628 = vadd.f32 %v1626, %v1627
        %v1629 = vrot.slane %v1622, 4
        %v1630 = vadd.f32 %v1622, %v1629
        %v1631 = vrot.slane %v1630, 2
        %v1632 = vadd.f32 %v1630, %v1631
        %v1633 = vrot.slane %v1632, 1
        %v1634 = vadd.f32 %v1632, %v1633
        %v1635 = vrcp.pop %v1628
        %v1636 = vmul.f32 %v1442, %v1635
        %v1637 = vmul.f32 %v1444, %v1635
        %v1638 = vmul.f32 %v1446, %v1635
        %v1639 = vmul.f32 %v1448, %v1635
        %v1640 = vmul.f32 %v1450, %v1635
        %v1641 = vmul.f32 %v1452, %v1635
        %v1642 = vmul.f32 %v1454, %v1635
        %v1643 = vmul.f32 %v1456, %v1635
        %v1644 = vrcp.pop %v1634
        %v1645 = vmul.f32 %v1458, %v1644
        %v1646 = vmul.f32 %v1460, %v1644
        %v1647 = vmul.f32 %v1462, %v1644
        %v1648 = vmul.f32 %v1464, %v1644
        %v1649 = vmul.f32 %v1466, %v1644
        %v1650 = vmul.f32 %v1468, %v1644
        %v1651 = vmul.f32 %v1470, %v1644
        %v1652 = vmul.f32 %v1472, %v1644
        %v1653 = vpack.c.bf16 %v1636, %v1636
        %v1654 = vpack.c.bf16 %v1637, %v1637
        %v1655 = vpack.c.bf16 %v1638, %v1638
        %v1656 = vpack.c.bf16 %v1639, %v1639
        %v1657 = vpack.c.bf16 %v1640, %v1640
        %v1658 = vpack.c.bf16 %v1641, %v1641
        %v1659 = vpack.c.bf16 %v1642, %v1642
        %v1660 = vpack.c.bf16 %v1643, %v1643
        %v1661 = vpack.c.bf16 %v1645, %v1645
        %v1662 = vpack.c.bf16 %v1646, %v1646
        %v1663 = vpack.c.bf16 %v1647, %v1647
        %v1664 = vpack.c.bf16 %v1648, %v1648
        %v1665 = vpack.c.bf16 %v1649, %v1649
        %v1666 = vpack.c.bf16 %v1650, %v1650
        %v1667 = vpack.c.bf16 %v1651, %v1651
        %v1668 = vpack.c.bf16 %v1652, %v1652
        %v1669 = vpack.c.bf16 %v673, %v673
        %v1670 = vpack.c.bf16 %v677, %v677
        %v1671 = vld [vmem:[%s305 + $0x1] sm:$0x1]
        %s1672 = sadd.s32 %s776, 1
        %s1673 = sld [smem:[#allocation6 + %s1672]]
        %v1676 = vcombine.high %v718, %v718
        %v1678 = vunpack.c.l.s4 1966171168
        %v1679 = vunpack.c.0.s8 %v1678
        %v1680 = vlaneseq
        %v1681 = vshrl.u32 %v1680, 7
        %v1682 = vsub.s32 %v1679, %v1681
        %v1683 = vrot.slane %v718, %v1682
        %v1685 = vunpack.c.l.s4 1966171168
        %v1686 = vunpack.c.0.s8 %v1685
        %v1687 = vlaneseq
        %v1688 = vshrl.u32 %v1687, 7
        %v1689 = vsub.s32 %v1686, %v1688
        %v1690 = vrot.slane %v1676, %v1689
        %v1691 = vcombine.high %v1683, %v1683
        %v1692 = vcombine.high %v1690, %v1690
        %v1694 = vunpack.c.l.s4 1966171168
        %v1695 = vunpack.c.0.s8 %v1694
        %v1696 = vlaneseq
        %v1697 = vshrl.u32 %v1696, 7
        %v1698 = vsub.s32 %v1695, %v1697
        %v1699 = vrot.slane %v1683, %v1698
        %v1701 = vunpack.c.l.s4 1966171168
        %v1702 = vunpack.c.0.s8 %v1701
        %v1703 = vlaneseq
        %v1704 = vshrl.u32 %v1703, 7
        %v1705 = vsub.s32 %v1702, %v1704
        %v1706 = vrot.slane %v1690, %v1705
        %v1708 = vunpack.c.l.s4 1966171168
        %v1709 = vunpack.c.0.s8 %v1708
        %v1710 = vlaneseq
        %v1711 = vshrl.u32 %v1710, 7
        %v1712 = vsub.s32 %v1709, %v1711
        %v1713 = vrot.slane %v1691, %v1712
        %v1715 = vunpack.c.l.s4 1966171168
        %v1716 = vunpack.c.0.s8 %v1715
        %v1717 = vlaneseq
        %v1718 = vshrl.u32 %v1717, 7
        %v1719 = vsub.s32 %v1716, %v1718
        %v1720 = vrot.slane %v1692, %v1719
        %v1721 = vcombine.high %v1699, %v1699
        %v1722 = vcombine.high %v1706, %v1706
        %v1723 = vcombine.high %v1713, %v1713
        %v1724 = vcombine.high %v1720, %v1720
        %v1725 = vcombine.high %v722, %v722
        %v1727 = vunpack.c.l.s4 1966171168
        %v1728 = vunpack.c.0.s8 %v1727
        %v1729 = vlaneseq
        %v1730 = vshrl.u32 %v1729, 7
        %v1731 = vsub.s32 %v1728, %v1730
        %v1732 = vrot.slane %v722, %v1731
        %v1734 = vunpack.c.l.s4 1966171168
        %v1735 = vunpack.c.0.s8 %v1734
        %v1736 = vlaneseq
        %v1737 = vshrl.u32 %v1736, 7
        %v1738 = vsub.s32 %v1735, %v1737
        %v1739 = vrot.slane %v1725, %v1738
        %v1740 = vcombine.high %v1732, %v1732
        %v1741 = vcombine.high %v1739, %v1739
        %v1743 = vunpack.c.l.s4 1966171168
        %v1744 = vunpack.c.0.s8 %v1743
        %v1745 = vlaneseq
        %v1746 = vshrl.u32 %v1745, 7
        %v1747 = vsub.s32 %v1744, %v1746
        %v1748 = vrot.slane %v1732, %v1747
        %v1750 = vunpack.c.l.s4 1966171168
        %v1751 = vunpack.c.0.s8 %v1750
        %v1752 = vlaneseq
        %v1753 = vshrl.u32 %v1752, 7
        %v1754 = vsub.s32 %v1751, %v1753
        %v1755 = vrot.slane %v1739, %v1754
        %v1757 = vunpack.c.l.s4 1966171168
        %v1758 = vunpack.c.0.s8 %v1757
        %v1759 = vlaneseq
        %v1760 = vshrl.u32 %v1759, 7
        %v1761 = vsub.s32 %v1758, %v1760
        %v1762 = vrot.slane %v1740, %v1761
        %v1764 = vunpack.c.l.s4 1966171168
        %v1765 = vunpack.c.0.s8 %v1764
        %v1766 = vlaneseq
        %v1767 = vshrl.u32 %v1766, 7
        %v1768 = vsub.s32 %v1765, %v1767
        %v1769 = vrot.slane %v1741, %v1768
        %v1770 = vcombine.high %v1748, %v1748
        %v1771 = vcombine.high %v1755, %v1755
        %v1772 = vcombine.high %v1762, %v1762
        %v1773 = vcombine.high %v1769, %v1769
        %v1774 = vlaneseq
        %v1775 = vshrl.u32 %v1774, 7
        %v1776 = vsub.s32 0, %v1775
        %v1777 = vrot.slane %v1699, %v1776
        %v1778 = vlaneseq
        %v1779 = vshrl.u32 %v1778, 7
        %v1780 = vsub.s32 0, %v1779
        %v1781 = vrot.slane %v1713, %v1780
        %v1782 = vlaneseq
        %v1783 = vshrl.u32 %v1782, 7
        %v1784 = vsub.s32 0, %v1783
        %v1785 = vrot.slane %v1721, %v1784
        %v1786 = vlaneseq
        %v1787 = vshrl.u32 %v1786, 7
        %v1788 = vsub.s32 0, %v1787
        %v1789 = vrot.slane %v1723, %v1788
        %v1790 = vlaneseq
        %v1791 = vshrl.u32 %v1790, 7
        %v1792 = vsub.s32 0, %v1791
        %v1793 = vrot.slane %v1706, %v1792
        %v1794 = vlaneseq
        %v1795 = vshrl.u32 %v1794, 7
        %v1796 = vsub.s32 0, %v1795
        %v1797 = vrot.slane %v1720, %v1796
        %v1798 = vlaneseq
        %v1799 = vshrl.u32 %v1798, 7
        %v1800 = vsub.s32 0, %v1799
        %v1801 = vrot.slane %v1722, %v1800
        %v1802 = vlaneseq
        %v1803 = vshrl.u32 %v1802, 7
        %v1804 = vsub.s32 0, %v1803
        %v1805 = vrot.slane %v1724, %v1804
        %v1806 = vlaneseq
        %v1807 = vshrl.u32 %v1806, 7
        %v1808 = vsub.s32 0, %v1807
        %v1809 = vrot.slane %v1748, %v1808
        %v1810 = vlaneseq
        %v1811 = vshrl.u32 %v1810, 7
        %v1812 = vsub.s32 0, %v1811
        %v1813 = vrot.slane %v1762, %v1812
        %v1814 = vlaneseq
        %v1815 = vshrl.u32 %v1814, 7
        %v1816 = vsub.s32 0, %v1815
        %v1817 = vrot.slane %v1770, %v1816
        %v1818 = vlaneseq
        %v1819 = vshrl.u32 %v1818, 7
        %v1820 = vsub.s32 0, %v1819
        %v1821 = vrot.slane %v1772, %v1820
        %v1822 = vlaneseq
        %v1823 = vshrl.u32 %v1822, 7
        %v1824 = vsub.s32 0, %v1823
        %v1825 = vrot.slane %v1755, %v1824
        %v1826 = vlaneseq
        %v1827 = vshrl.u32 %v1826, 7
        %v1828 = vsub.s32 0, %v1827
        %v1829 = vrot.slane %v1769, %v1828
        %v1830 = vlaneseq
        %v1831 = vshrl.u32 %v1830, 7
        %v1832 = vsub.s32 0, %v1831
        %v1833 = vrot.slane %v1771, %v1832
        %v1834 = vlaneseq
        %v1835 = vshrl.u32 %v1834, 7
        %v1836 = vsub.s32 0, %v1835
        %v1837 = vrot.slane %v1773, %v1836
        %v1854 = vadd.f32 %v1777, %v761
        %v1855 = vadd.f32 %v1781, %v761
        %v1856 = vadd.f32 %v1785, %v761
        %v1857 = vadd.f32 %v1789, %v761
        %v1858 = vadd.f32 %v1793, %v761
        %v1859 = vadd.f32 %v1797, %v761
        %v1860 = vadd.f32 %v1801, %v761
        %v1861 = vadd.f32 %v1805, %v761
        %v1862 = vadd.f32 %v1809, %v765
        %v1863 = vadd.f32 %v1813, %v765
        %v1864 = vadd.f32 %v1817, %v765
        %v1865 = vadd.f32 %v1821, %v765
        %v1866 = vadd.f32 %v1825, %v765
        %v1867 = vadd.f32 %v1829, %v765
        %v1868 = vadd.f32 %v1833, %v765
        %v1869 = vadd.f32 %v1837, %v765
        %v1870 = vmax.f32 %v1854, 0.0
        %v1871 = vmax.f32 %v1855, 0.0
        %v1872 = vmax.f32 %v1856, 0.0
        %v1873 = vmax.f32 %v1857, 0.0
        %v1874 = vmax.f32 %v1858, 0.0
        %v1875 = vmax.f32 %v1859, 0.0
        %v1876 = vmax.f32 %v1860, 0.0
        %v1877 = vmax.f32 %v1861, 0.0
        %v1878 = vmax.f32 %v1862, 0.0
        %v1879 = vmax.f32 %v1863, 0.0
        %v1880 = vmax.f32 %v1864, 0.0
        %v1881 = vmax.f32 %v1865, 0.0
        %v1882 = vmax.f32 %v1866, 0.0
        %v1883 = vmax.f32 %v1867, 0.0
        %v1884 = vmax.f32 %v1868, 0.0
        %v1885 = vmax.f32 %v1869, 0.0
        %v1886 = vlaneseq
        %v1887 = vshrl.u32 %v1886, 7
        %v1888 = vsub.s32 0, %v1887
        %v1889 = vrot.slane %v1671, %v1888
        %v1890 = vmul.f32 %v1870, %v1889
        %v1891 = vmul.f32 %v1871, %v1889
        %v1892 = vmul.f32 %v1872, %v1889
        %v1893 = vmul.f32 %v1873, %v1889
        %v1894 = vmul.f32 %v1874, %v1889
        %v1895 = vmul.f32 %v1875, %v1889
        %v1896 = vmul.f32 %v1876, %v1889
        %v1897 = vmul.f32 %v1877, %v1889
        %v1898 = vmul.f32 %v1878, %v1889
        %v1899 = vmul.f32 %v1879, %v1889
        %v1900 = vmul.f32 %v1880, %v1889
        %v1901 = vmul.f32 %v1881, %v1889
        %v1902 = vmul.f32 %v1882, %v1889
        %v1903 = vmul.f32 %v1883, %v1889
        %v1904 = vmul.f32 %v1884, %v1889
        %v1905 = vmul.f32 %v1885, %v1889
        %1906 = vadd.xlane.f32.xlu0 %v1890
        %v1907 = vpop.xlane.xlu0 %1906
        %1908 = vadd.xlane.f32.xlu0 %v1891
        %v1909 = vpop.xlane.xlu0 %1908
        %1910 = vadd.xlane.f32.xlu0 %v1892
        %v1911 = vpop.xlane.xlu0 %1910
        %1912 = vadd.xlane.f32.xlu0 %v1893
        %v1913 = vpop.xlane.xlu0 %1912
        %1914 = vadd.xlane.f32.xlu0 %v1894
        %v1915 = vpop.xlane.xlu0 %1914
        %1916 = vadd.xlane.f32.xlu0 %v1895
        %v1917 = vpop.xlane.xlu0 %1916
        %1918 = vadd.xlane.f32.xlu0 %v1896
        %v1919 = vpop.xlane.xlu0 %1918
        %1920 = vadd.xlane.f32.xlu0 %v1897
        %v1921 = vpop.xlane.xlu0 %1920
        %1922 = vadd.xlane.f32.xlu0 %v1898
        %v1923 = vpop.xlane.xlu0 %1922
        %1924 = vadd.xlane.f32.xlu0 %v1899
        %v1925 = vpop.xlane.xlu0 %1924
        %1926 = vadd.xlane.f32.xlu0 %v1900
        %v1927 = vpop.xlane.xlu0 %1926
        %1928 = vadd.xlane.f32.xlu0 %v1901
        %v1929 = vpop.xlane.xlu0 %1928
        %1930 = vadd.xlane.f32.xlu0 %v1902
        %v1931 = vpop.xlane.xlu0 %1930
        %1932 = vadd.xlane.f32.xlu0 %v1903
        %v1933 = vpop.xlane.xlu0 %1932
        %1934 = vadd.xlane.f32.xlu0 %v1904
        %v1935 = vpop.xlane.xlu0 %1934
        %1936 = vadd.xlane.f32.xlu0 %v1905
        %v1937 = vpop.xlane.xlu0 %1936
        %v1938 = vstv %s1673
        %v1939 = vadd.f32 %v1907, %v1938
        %v1940 = vadd.f32 %v1909, %v1938
        %v1941 = vadd.f32 %v1911, %v1938
        %v1942 = vadd.f32 %v1913, %v1938
        %v1943 = vadd.f32 %v1915, %v1938
        %v1944 = vadd.f32 %v1917, %v1938
        %v1945 = vadd.f32 %v1919, %v1938
        %v1946 = vadd.f32 %v1921, %v1938
        %v1947 = vadd.f32 %v1923, %v1938
        %v1948 = vadd.f32 %v1925, %v1938
        %v1949 = vadd.f32 %v1927, %v1938
        %v1950 = vadd.f32 %v1929, %v1938
        %v1951 = vadd.f32 %v1931, %v1938
        %v1952 = vadd.f32 %v1933, %v1938
        %v1953 = vadd.f32 %v1935, %v1938
        %v1954 = vadd.f32 %v1937, %v1938
        %vm1955 = vcmp.gt.f32.partialorder %v1939, 0.0
        %vm1956 = vcmp.gt.f32.partialorder %v1940, 0.0
        %vm1957 = vcmp.gt.f32.partialorder %v1941, 0.0
        %vm1958 = vcmp.gt.f32.partialorder %v1942, 0.0
        %vm1959 = vcmp.gt.f32.partialorder %v1943, 0.0
        %vm1960 = vcmp.gt.f32.partialorder %v1944, 0.0
        %vm1961 = vcmp.gt.f32.partialorder %v1945, 0.0
        %vm1962 = vcmp.gt.f32.partialorder %v1946, 0.0
        %vm1963 = vcmp.gt.f32.partialorder %v1947, 0.0
        %vm1964 = vcmp.gt.f32.partialorder %v1948, 0.0
        %vm1965 = vcmp.gt.f32.partialorder %v1949, 0.0
        %vm1966 = vcmp.gt.f32.partialorder %v1950, 0.0
        %vm1967 = vcmp.gt.f32.partialorder %v1951, 0.0
        %vm1968 = vcmp.gt.f32.partialorder %v1952, 0.0
        %vm1969 = vcmp.gt.f32.partialorder %v1953, 0.0
        %vm1970 = vcmp.gt.f32.partialorder %v1954, 0.0
        %v1971 = vmul.f32 %v1939, 0.01
        %v1972 = vmul.f32 %v1940, 0.01
        %v1973 = vmul.f32 %v1941, 0.01
        %v1974 = vmul.f32 %v1942, 0.01
        %v1975 = vmul.f32 %v1943, 0.01
        %v1976 = vmul.f32 %v1944, 0.01
        %v1977 = vmul.f32 %v1945, 0.01
        %v1978 = vmul.f32 %v1946, 0.01
        %v1979 = vmul.f32 %v1947, 0.01
        %v1980 = vmul.f32 %v1948, 0.01
        %v1981 = vmul.f32 %v1949, 0.01
        %v1982 = vmul.f32 %v1950, 0.01
        %v1983 = vmul.f32 %v1951, 0.01
        %v1984 = vmul.f32 %v1952, 0.01
        %v1985 = vmul.f32 %v1953, 0.01
        %v1986 = vmul.f32 %v1954, 0.01
        %v1987 = vsel %vm1955, %v1939, %v1971
        %v1988 = vsel %vm1956, %v1940, %v1972
        %v1989 = vsel %vm1957, %v1941, %v1973
        %v1990 = vsel %vm1958, %v1942, %v1974
        %v1991 = vsel %vm1959, %v1943, %v1975
        %v1992 = vsel %vm1960, %v1944, %v1976
        %v1993 = vsel %vm1961, %v1945, %v1977
        %v1994 = vsel %vm1962, %v1946, %v1978
        %v1995 = vsel %vm1963, %v1947, %v1979
        %v1996 = vsel %vm1964, %v1948, %v1980
        %v1997 = vsel %vm1965, %v1949, %v1981
        %v1998 = vsel %vm1966, %v1950, %v1982
        %v1999 = vsel %vm1967, %v1951, %v1983
        %v2000 = vsel %vm1968, %v1952, %v1984
        %v2001 = vsel %vm1969, %v1953, %v1985
        %v2002 = vsel %vm1970, %v1954, %v1986
        %v2005 = vlaneseq
        %v2006 = vshrl.u32 %v2005, 7
        %v2007 = vsub.s32 0, %v2006
        %v2008 = vrot.slane %v772, %v2007
        %2010 = vbcast.lane.b32.xlu0 %v2008, 256
        %v2011 = vpop.permute.xlu0 %2010
        %v2012 = vlaneseq
        %v2013 = vshrl.u32 %v2012, 7
        %v2014 = vsub.s32 1, %v2013
        %v2015 = vrot.slane %v772, %v2014
        %2017 = vbcast.lane.b32.xlu0 %v2015, 256
        %v2018 = vpop.permute.xlu0 %2017
        %v2019 = vlaneseq
        %v2020 = vshrl.u32 %v2019, 7
        %v2021 = vsub.s32 2, %v2020
        %v2022 = vrot.slane %v772, %v2021
        %2024 = vbcast.lane.b32.xlu0 %v2022, 256
        %v2025 = vpop.permute.xlu0 %2024
        %v2026 = vlaneseq
        %v2027 = vshrl.u32 %v2026, 7
        %v2028 = vsub.s32 3, %v2027
        %v2029 = vrot.slane %v772, %v2028
        %2031 = vbcast.lane.b32.xlu0 %v2029, 256
        %v2032 = vpop.permute.xlu0 %2031
        %v2033 = vlaneseq
        %v2034 = vshrl.u32 %v2033, 7
        %v2035 = vsub.s32 4, %v2034
        %v2036 = vrot.slane %v772, %v2035
        %2038 = vbcast.lane.b32.xlu0 %v2036, 256
        %v2039 = vpop.permute.xlu0 %2038
        %v2040 = vlaneseq
        %v2041 = vshrl.u32 %v2040, 7
        %v2042 = vsub.s32 5, %v2041
        %v2043 = vrot.slane %v772, %v2042
        %2045 = vbcast.lane.b32.xlu0 %v2043, 256
        %v2046 = vpop.permute.xlu0 %2045
        %v2047 = vlaneseq
        %v2048 = vshrl.u32 %v2047, 7
        %v2049 = vsub.s32 6, %v2048
        %v2050 = vrot.slane %v772, %v2049
        %2052 = vbcast.lane.b32.xlu0 %v2050, 256
        %v2053 = vpop.permute.xlu0 %2052
        %v2054 = vlaneseq
        %v2055 = vshrl.u32 %v2054, 7
        %v2056 = vsub.s32 7, %v2055
        %v2057 = vrot.slane %v772, %v2056
        %2059 = vbcast.lane.b32.xlu0 %v2057, 256
        %v2060 = vpop.permute.xlu0 %2059
        %v2061 = vlaneseq
        %v2062 = vshrl.u32 %v2061, 7
        %v2063 = vsub.s32 0, %v2062
        %v2064 = vrot.slane %v774, %v2063
        %2066 = vbcast.lane.b32.xlu0 %v2064, 256
        %v2067 = vpop.permute.xlu0 %2066
        %v2068 = vlaneseq
        %v2069 = vshrl.u32 %v2068, 7
        %v2070 = vsub.s32 1, %v2069
        %v2071 = vrot.slane %v774, %v2070
        %2073 = vbcast.lane.b32.xlu0 %v2071, 256
        %v2074 = vpop.permute.xlu0 %2073
        %v2075 = vlaneseq
        %v2076 = vshrl.u32 %v2075, 7
        %v2077 = vsub.s32 2, %v2076
        %v2078 = vrot.slane %v774, %v2077
        %2080 = vbcast.lane.b32.xlu0 %v2078, 256
        %v2081 = vpop.permute.xlu0 %2080
        %v2082 = vlaneseq
        %v2083 = vshrl.u32 %v2082, 7
        %v2084 = vsub.s32 3, %v2083
        %v2085 = vrot.slane %v774, %v2084
        %2087 = vbcast.lane.b32.xlu0 %v2085, 256
        %v2088 = vpop.permute.xlu0 %2087
        %v2089 = vlaneseq
        %v2090 = vshrl.u32 %v2089, 7
        %v2091 = vsub.s32 4, %v2090
        %v2092 = vrot.slane %v774, %v2091
        %2094 = vbcast.lane.b32.xlu0 %v2092, 256
        %v2095 = vpop.permute.xlu0 %2094
        %v2096 = vlaneseq
        %v2097 = vshrl.u32 %v2096, 7
        %v2098 = vsub.s32 5, %v2097
        %v2099 = vrot.slane %v774, %v2098
        %2101 = vbcast.lane.b32.xlu0 %v2099, 256
        %v2102 = vpop.permute.xlu0 %2101
        %v2103 = vlaneseq
        %v2104 = vshrl.u32 %v2103, 7
        %v2105 = vsub.s32 6, %v2104
        %v2106 = vrot.slane %v774, %v2105
        %2108 = vbcast.lane.b32.xlu0 %v2106, 256
        %v2109 = vpop.permute.xlu0 %2108
        %v2110 = vlaneseq
        %v2111 = vshrl.u32 %v2110, 7
        %v2112 = vsub.s32 7, %v2111
        %v2113 = vrot.slane %v774, %v2112
        %2115 = vbcast.lane.b32.xlu0 %v2113, 256
        %v2116 = vpop.permute.xlu0 %2115
        %v2133 = vadd.f32 %v1987, %v2011
        %v2134 = vadd.f32 %v1988, %v2018
        %v2135 = vadd.f32 %v1989, %v2025
        %v2136 = vadd.f32 %v1990, %v2032
        %v2137 = vadd.f32 %v1991, %v2039
        %v2138 = vadd.f32 %v1992, %v2046
        %v2139 = vadd.f32 %v1993, %v2053
        %v2140 = vadd.f32 %v1994, %v2060
        %v2141 = vadd.f32 %v1995, %v2067
        %v2142 = vadd.f32 %v1996, %v2074
        %v2143 = vadd.f32 %v1997, %v2081
        %v2144 = vadd.f32 %v1998, %v2088
        %v2145 = vadd.f32 %v1999, %v2095
        %v2146 = vadd.f32 %v2000, %v2102
        %v2147 = vadd.f32 %v2001, %v2109
        %v2148 = vadd.f32 %v2002, %v2116
        %2165 = vset.pattern.permute.xlu0 0
        %2166 = vperm.xlu0 %2165, %v2133
        %v2167 = vpop.permute.xlu0 %2166
        %2168 = vset.pattern.permute.xlu0 0
        %2169 = vperm.xlu0 %2168, %v2134
        %v2170 = vpop.permute.xlu0 %2169
        %2171 = vset.pattern.permute.xlu0 0
        %2172 = vperm.xlu0 %2171, %v2135
        %v2173 = vpop.permute.xlu0 %2172
        %2174 = vset.pattern.permute.xlu0 0
        %2175 = vperm.xlu0 %2174, %v2136
        %v2176 = vpop.permute.xlu0 %2175
        %2177 = vset.pattern.permute.xlu0 0
        %2178 = vperm.xlu0 %2177, %v2137
        %v2179 = vpop.permute.xlu0 %2178
        %2180 = vset.pattern.permute.xlu0 0
        %2181 = vperm.xlu0 %2180, %v2138
        %v2182 = vpop.permute.xlu0 %2181
        %2183 = vset.pattern.permute.xlu0 0
        %2184 = vperm.xlu0 %2183, %v2139
        %v2185 = vpop.permute.xlu0 %2184
        %2186 = vset.pattern.permute.xlu0 0
        %2187 = vperm.xlu0 %2186, %v2140
        %v2188 = vpop.permute.xlu0 %2187
        %2189 = vset.pattern.permute.xlu0 0
        %2190 = vperm.xlu0 %2189, %v2141
        %v2191 = vpop.permute.xlu0 %2190
        %2192 = vset.pattern.permute.xlu0 0
        %2193 = vperm.xlu0 %2192, %v2142
        %v2194 = vpop.permute.xlu0 %2193
        %2195 = vset.pattern.permute.xlu0 0
        %2196 = vperm.xlu0 %2195, %v2143
        %v2197 = vpop.permute.xlu0 %2196
        %2198 = vset.pattern.permute.xlu0 0
        %2199 = vperm.xlu0 %2198, %v2144
        %v2200 = vpop.permute.xlu0 %2199
        %2201 = vset.pattern.permute.xlu0 0
        %2202 = vperm.xlu0 %2201, %v2145
        %v2203 = vpop.permute.xlu0 %2202
        %2204 = vset.pattern.permute.xlu0 0
        %2205 = vperm.xlu0 %2204, %v2146
        %v2206 = vpop.permute.xlu0 %2205
        %2207 = vset.pattern.permute.xlu0 0
        %2208 = vperm.xlu0 %2207, %v2147
        %v2209 = vpop.permute.xlu0 %2208
        %2210 = vset.pattern.permute.xlu0 0
        %2211 = vperm.xlu0 %2210, %v2148
        %v2212 = vpop.permute.xlu0 %2211
        %v2213 = vlaneseq
        %v2214 = vshrl.u32 %v2213, 7
        %v2215 = vsub.s32 %v1318, %v2214
        %v2216 = vrot.slane %v2167, %v2215
        %v2217 = vlaneseq
        %v2218 = vshrl.u32 %v2217, 7
        %v2219 = vsub.s32 %v1318, %v2218
        %v2220 = vrot.slane %v2170, %v2219
        %v2221 = vlaneseq
        %v2222 = vshrl.u32 %v2221, 7
        %v2223 = vsub.s32 %v1318, %v2222
        %v2224 = vrot.slane %v2173, %v2223
        %v2225 = vlaneseq
        %v2226 = vshrl.u32 %v2225, 7
        %v2227 = vsub.s32 %v1318, %v2226
        %v2228 = vrot.slane %v2176, %v2227
        %v2229 = vlaneseq
        %v2230 = vshrl.u32 %v2229, 7
        %v2231 = vsub.s32 %v1318, %v2230
        %v2232 = vrot.slane %v2179, %v2231
        %v2233 = vlaneseq
        %v2234 = vshrl.u32 %v2233, 7
        %v2235 = vsub.s32 %v1318, %v2234
        %v2236 = vrot.slane %v2182, %v2235
        %v2237 = vlaneseq
        %v2238 = vshrl.u32 %v2237, 7
        %v2239 = vsub.s32 %v1318, %v2238
        %v2240 = vrot.slane %v2185, %v2239
        %v2241 = vlaneseq
        %v2242 = vshrl.u32 %v2241, 7
        %v2243 = vsub.s32 %v1318, %v2242
        %v2244 = vrot.slane %v2188, %v2243
        %v2245 = vlaneseq
        %v2246 = vshrl.u32 %v2245, 7
        %v2247 = vsub.s32 %v1318, %v2246
        %v2248 = vrot.slane %v2191, %v2247
        %v2249 = vlaneseq
        %v2250 = vshrl.u32 %v2249, 7
        %v2251 = vsub.s32 %v1318, %v2250
        %v2252 = vrot.slane %v2194, %v2251
        %v2253 = vlaneseq
        %v2254 = vshrl.u32 %v2253, 7
        %v2255 = vsub.s32 %v1318, %v2254
        %v2256 = vrot.slane %v2197, %v2255
        %v2257 = vlaneseq
        %v2258 = vshrl.u32 %v2257, 7
        %v2259 = vsub.s32 %v1318, %v2258
        %v2260 = vrot.slane %v2200, %v2259
        %v2261 = vlaneseq
        %v2262 = vshrl.u32 %v2261, 7
        %v2263 = vsub.s32 %v1318, %v2262
        %v2264 = vrot.slane %v2203, %v2263
        %v2265 = vlaneseq
        %v2266 = vshrl.u32 %v2265, 7
        %v2267 = vsub.s32 %v1318, %v2266
        %v2268 = vrot.slane %v2206, %v2267
        %v2269 = vlaneseq
        %v2270 = vshrl.u32 %v2269, 7
        %v2271 = vsub.s32 %v1318, %v2270
        %v2272 = vrot.slane %v2209, %v2271
        %v2273 = vlaneseq
        %v2274 = vshrl.u32 %v2273, 7
        %v2275 = vsub.s32 %v1318, %v2274
        %v2276 = vrot.slane %v2212, %v2275
        %v2277 = vsel %vm1383, %v2220, %v2216
        %v2278 = vsel %vm1385, %v2224, %v2277
        %v2279 = vsel %vm1387, %v2228, %v2278
        %v2280 = vsel %vm1389, %v2232, %v2279
        %v2281 = vsel %vm1391, %v2236, %v2280
        %v2282 = vsel %vm1393, %v2240, %v2281
        %v2283 = vsel %vm1395, %v2244, %v2282
        %v2284 = vsel %vm1383, %v2252, %v2248
        %v2285 = vsel %vm1385, %v2256, %v2284
        %v2286 = vsel %vm1387, %v2260, %v2285
        %v2287 = vsel %vm1389, %v2264, %v2286
        %v2288 = vsel %vm1391, %v2268, %v2287
        %v2289 = vsel %vm1393, %v2272, %v2288
        %v2290 = vsel %vm1395, %v2276, %v2289
        %v2293 = vsel %vm1406, %v2283, -inf
        %2294 = vmax.xlane.f32.xlu0 %v2293
        %v2295 = vpop.xlane.xlu0 %2294
        %v2296 = vsel %vm1406, %v2290, -inf
        %2297 = vmax.xlane.f32.xlu0 %v2296
        %v2298 = vpop.xlane.xlu0 %2297
        %v2299 = vrot.slane %v2295, 4
        %v2300 = vmax.f32 %v2295, %v2299
        %v2301 = vrot.slane %v2300, 2
        %v2302 = vmax.f32 %v2300, %v2301
        %v2303 = vrot.slane %v2302, 1
        %v2304 = vmax.f32 %v2302, %v2303
        %v2305 = vrot.slane %v2298, 4
        %v2306 = vmax.f32 %v2298, %v2305
        %v2307 = vrot.slane %v2306, 2
        %v2308 = vmax.f32 %v2306, %v2307
        %v2309 = vrot.slane %v2308, 1
        %v2310 = vmax.f32 %v2308, %v2309
        %v2311 = vsub.f32 %v2133, %v2304
        %v2312 = vsub.f32 %v2134, %v2304
        %v2313 = vsub.f32 %v2135, %v2304
        %v2314 = vsub.f32 %v2136, %v2304
        %v2315 = vsub.f32 %v2137, %v2304
        %v2316 = vsub.f32 %v2138, %v2304
        %v2317 = vsub.f32 %v2139, %v2304
        %v2318 = vsub.f32 %v2140, %v2304
        %v2319 = vsub.f32 %v2141, %v2310
        %v2320 = vsub.f32 %v2142, %v2310
        %v2321 = vsub.f32 %v2143, %v2310
        %v2322 = vsub.f32 %v2144, %v2310
        %v2323 = vsub.f32 %v2145, %v2310
        %v2324 = vsub.f32 %v2146, %v2310
        %v2325 = vsub.f32 %v2147, %v2310
        %v2326 = vsub.f32 %v2148, %v2310
        %v2327 = vmul.f32 %v2311, 1.442695
        %v2328 = vpow.pop %v2327
        %v2329 = vmul.f32 %v2312, 1.442695
        %v2330 = vpow.pop %v2329
        %v2331 = vmul.f32 %v2313, 1.442695
        %v2332 = vpow.pop %v2331
        %v2333 = vmul.f32 %v2314, 1.442695
        %v2334 = vpow.pop %v2333
        %v2335 = vmul.f32 %v2315, 1.442695
        %v2336 = vpow.pop %v2335
        %v2337 = vmul.f32 %v2316, 1.442695
        %v2338 = vpow.pop %v2337
        %v2339 = vmul.f32 %v2317, 1.442695
        %v2340 = vpow.pop %v2339
        %v2341 = vmul.f32 %v2318, 1.442695
        %v2342 = vpow.pop %v2341
        %v2343 = vmul.f32 %v2319, 1.442695
        %v2344 = vpow.pop %v2343
        %v2345 = vmul.f32 %v2320, 1.442695
        %v2346 = vpow.pop %v2345
        %v2347 = vmul.f32 %v2321, 1.442695
        %v2348 = vpow.pop %v2347
        %v2349 = vmul.f32 %v2322, 1.442695
        %v2350 = vpow.pop %v2349
        %v2351 = vmul.f32 %v2323, 1.442695
        %v2352 = vpow.pop %v2351
        %v2353 = vmul.f32 %v2324, 1.442695
        %v2354 = vpow.pop %v2353
        %v2355 = vmul.f32 %v2325, 1.442695
        %v2356 = vpow.pop %v2355
        %v2357 = vmul.f32 %v2326, 1.442695
        %v2358 = vpow.pop %v2357
        %2375 = vset.pattern.permute.xlu0 0
        %2376 = vperm.xlu0 %2375, %v2328
        %v2377 = vpop.permute.xlu0 %2376
        %2378 = vset.pattern.permute.xlu0 0
        %2379 = vperm.xlu0 %2378, %v2330
        %v2380 = vpop.permute.xlu0 %2379
        %2381 = vset.pattern.permute.xlu0 0
        %2382 = vperm.xlu0 %2381, %v2332
        %v2383 = vpop.permute.xlu0 %2382
        %2384 = vset.pattern.permute.xlu0 0
        %2385 = vperm.xlu0 %2384, %v2334
        %v2386 = vpop.permute.xlu0 %2385
        %2387 = vset.pattern.permute.xlu0 0
        %2388 = vperm.xlu0 %2387, %v2336
        %v2389 = vpop.permute.xlu0 %2388
        %2390 = vset.pattern.permute.xlu0 0
        %2391 = vperm.xlu0 %2390, %v2338
        %v2392 = vpop.permute.xlu0 %2391
        %2393 = vset.pattern.permute.xlu0 0
        %2394 = vperm.xlu0 %2393, %v2340
        %v2395 = vpop.permute.xlu0 %2394
        %2396 = vset.pattern.permute.xlu0 0
        %2397 = vperm.xlu0 %2396, %v2342
        %v2398 = vpop.permute.xlu0 %2397
        %2399 = vset.pattern.permute.xlu0 0
        %2400 = vperm.xlu0 %2399, %v2344
        %v2401 = vpop.permute.xlu0 %2400
        %2402 = vset.pattern.permute.xlu0 0
        %2403 = vperm.xlu0 %2402, %v2346
        %v2404 = vpop.permute.xlu0 %2403
        %2405 = vset.pattern.permute.xlu0 0
        %2406 = vperm.xlu0 %2405, %v2348
        %v2407 = vpop.permute.xlu0 %2406
        %2408 = vset.pattern.permute.xlu0 0
        %2409 = vperm.xlu0 %2408, %v2350
        %v2410 = vpop.permute.xlu0 %2409
        %2411 = vset.pattern.permute.xlu0 0
        %2412 = vperm.xlu0 %2411, %v2352
        %v2413 = vpop.permute.xlu0 %2412
        %2414 = vset.pattern.permute.xlu0 0
        %2415 = vperm.xlu0 %2414, %v2354
        %v2416 = vpop.permute.xlu0 %2415
        %2417 = vset.pattern.permute.xlu0 0
        %2418 = vperm.xlu0 %2417, %v2356
        %v2419 = vpop.permute.xlu0 %2418
        %2420 = vset.pattern.permute.xlu0 0
        %2421 = vperm.xlu0 %2420, %v2358
        %v2422 = vpop.permute.xlu0 %2421
        %v2423 = vlaneseq
        %v2424 = vshrl.u32 %v2423, 7
        %v2425 = vsub.s32 %v1318, %v2424
        %v2426 = vrot.slane %v2377, %v2425
        %v2427 = vlaneseq
        %v2428 = vshrl.u32 %v2427, 7
        %v2429 = vsub.s32 %v1318, %v2428
        %v2430 = vrot.slane %v2380, %v2429
        %v2431 = vlaneseq
        %v2432 = vshrl.u32 %v2431, 7
        %v2433 = vsub.s32 %v1318, %v2432
        %v2434 = vrot.slane %v2383, %v2433
        %v2435 = vlaneseq
        %v2436 = vshrl.u32 %v2435, 7
        %v2437 = vsub.s32 %v1318, %v2436
        %v2438 = vrot.slane %v2386, %v2437
        %v2439 = vlaneseq
        %v2440 = vshrl.u32 %v2439, 7
        %v2441 = vsub.s32 %v1318, %v2440
        %v2442 = vrot.slane %v2389, %v2441
        %v2443 = vlaneseq
        %v2444 = vshrl.u32 %v2443, 7
        %v2445 = vsub.s32 %v1318, %v2444
        %v2446 = vrot.slane %v2392, %v2445
        %v2447 = vlaneseq
        %v2448 = vshrl.u32 %v2447, 7
        %v2449 = vsub.s32 %v1318, %v2448
        %v2450 = vrot.slane %v2395, %v2449
        %v2451 = vlaneseq
        %v2452 = vshrl.u32 %v2451, 7
        %v2453 = vsub.s32 %v1318, %v2452
        %v2454 = vrot.slane %v2398, %v2453
        %v2455 = vlaneseq
        %v2456 = vshrl.u32 %v2455, 7
        %v2457 = vsub.s32 %v1318, %v2456
        %v2458 = vrot.slane %v2401, %v2457
        %v2459 = vlaneseq
        %v2460 = vshrl.u32 %v2459, 7
        %v2461 = vsub.s32 %v1318, %v2460
        %v2462 = vrot.slane %v2404, %v2461
        %v2463 = vlaneseq
        %v2464 = vshrl.u32 %v2463, 7
        %v2465 = vsub.s32 %v1318, %v2464
        %v2466 = vrot.slane %v2407, %v2465
        %v2467 = vlaneseq
        %v2468 = vshrl.u32 %v2467, 7
        %v2469 = vsub.s32 %v1318, %v2468
        %v2470 = vrot.slane %v2410, %v2469
        %v2471 = vlaneseq
        %v2472 = vshrl.u32 %v2471, 7
        %v2473 = vsub.s32 %v1318, %v2472
        %v2474 = vrot.slane %v2413, %v2473
        %v2475 = vlaneseq
        %v2476 = vshrl.u32 %v2475, 7
        %v2477 = vsub.s32 %v1318, %v2476
        %v2478 = vrot.slane %v2416, %v2477
        %v2479 = vlaneseq
        %v2480 = vshrl.u32 %v2479, 7
        %v2481 = vsub.s32 %v1318, %v2480
        %v2482 = vrot.slane %v2419, %v2481
        %v2483 = vlaneseq
        %v2484 = vshrl.u32 %v2483, 7
        %v2485 = vsub.s32 %v1318, %v2484
        %v2486 = vrot.slane %v2422, %v2485
        %v2487 = vsel %vm1383, %v2430, %v2426
        %v2488 = vsel %vm1385, %v2434, %v2487
        %v2489 = vsel %vm1387, %v2438, %v2488
        %v2490 = vsel %vm1389, %v2442, %v2489
        %v2491 = vsel %vm1391, %v2446, %v2490
        %v2492 = vsel %vm1393, %v2450, %v2491
        %v2493 = vsel %vm1395, %v2454, %v2492
        %v2494 = vsel %vm1383, %v2462, %v2458
        %v2495 = vsel %vm1385, %v2466, %v2494
        %v2496 = vsel %vm1387, %v2470, %v2495
        %v2497 = vsel %vm1389, %v2474, %v2496
        %v2498 = vsel %vm1391, %v2478, %v2497
        %v2499 = vsel %vm1393, %v2482, %v2498
        %v2500 = vsel %vm1395, %v2486, %v2499
        %v2503 = vsel %vm1406, %v2493, 0.0
        %2504 = vadd.xlane.f32.xlu0 %v2503
        %v2505 = vpop.xlane.xlu0 %2504
        %v2506 = vsel %vm1406, %v2500, 0.0
        %2507 = vadd.xlane.f32.xlu0 %v2506
        %v2508 = vpop.xlane.xlu0 %2507
        %v2509 = vrot.slane %v2505, 4
        %v2510 = vadd.f32 %v2505, %v2509
        %v2511 = vrot.slane %v2510, 2
        %v2512 = vadd.f32 %v2510, %v2511
        %v2513 = vrot.slane %v2512, 1
        %v2514 = vadd.f32 %v2512, %v2513
        %v2515 = vrot.slane %v2508, 4
        %v2516 = vadd.f32 %v2508, %v2515
        %v2517 = vrot.slane %v2516, 2
        %v2518 = vadd.f32 %v2516, %v2517
        %v2519 = vrot.slane %v2518, 1
        %v2520 = vadd.f32 %v2518, %v2519
        %v2521 = vrcp.pop %v2514
        %v2522 = vmul.f32 %v2328, %v2521
        %v2523 = vmul.f32 %v2330, %v2521
        %v2524 = vmul.f32 %v2332, %v2521
        %v2525 = vmul.f32 %v2334, %v2521
        %v2526 = vmul.f32 %v2336, %v2521
        %v2527 = vmul.f32 %v2338, %v2521
        %v2528 = vmul.f32 %v2340, %v2521
        %v2529 = vmul.f32 %v2342, %v2521
        %v2530 = vrcp.pop %v2520
        %v2531 = vmul.f32 %v2344, %v2530
        %v2532 = vmul.f32 %v2346, %v2530
        %v2533 = vmul.f32 %v2348, %v2530
        %v2534 = vmul.f32 %v2350, %v2530
        %v2535 = vmul.f32 %v2352, %v2530
        %v2536 = vmul.f32 %v2354, %v2530
        %v2537 = vmul.f32 %v2356, %v2530
        %v2538 = vmul.f32 %v2358, %v2530
        %v2539 = vpack.c.bf16 %v2522, %v2522
        %v2540 = vpack.c.bf16 %v2523, %v2523
        %v2541 = vpack.c.bf16 %v2524, %v2524
        %v2542 = vpack.c.bf16 %v2525, %v2525
        %v2543 = vpack.c.bf16 %v2526, %v2526
        %v2544 = vpack.c.bf16 %v2527, %v2527
        %v2545 = vpack.c.bf16 %v2528, %v2528
        %v2546 = vpack.c.bf16 %v2529, %v2529
        %v2547 = vpack.c.bf16 %v2531, %v2531
        %v2548 = vpack.c.bf16 %v2532, %v2532
        %v2549 = vpack.c.bf16 %v2533, %v2533
        %v2550 = vpack.c.bf16 %v2534, %v2534
        %v2551 = vpack.c.bf16 %v2535, %v2535
        %v2552 = vpack.c.bf16 %v2536, %v2536
        %v2553 = vpack.c.bf16 %v2537, %v2537
        %v2554 = vpack.c.bf16 %v2538, %v2538
        %v2555 = vpack.c.bf16 %v675, %v675
        %v2556 = vpack.c.bf16 %v679, %v679
        %v2565 = vunpack.c.l.b16 %v2539
        %v2566 = vunpack.c.l.b16 %v2540
        %v2567 = vunpack.c.l.b16 %v2541
        %v2568 = vunpack.c.l.b16 %v2542
        %v2569 = vunpack.c.l.b16 %v2543
        %v2570 = vunpack.c.l.b16 %v2544
        %v2571 = vunpack.c.l.b16 %v2545
        %v2572 = vunpack.c.l.b16 %v2546
        %2573 = vset.pattern.permute.xlu0 0
        %2574 = vperm.xlu0 %2573, %v2565
        %v2575 = vpop.permute.xlu0 %2574
        %2576 = vset.pattern.permute.xlu0 0
        %2577 = vperm.xlu0 %2576, %v2566
        %v2578 = vpop.permute.xlu0 %2577
        %2579 = vset.pattern.permute.xlu0 0
        %2580 = vperm.xlu0 %2579, %v2567
        %v2581 = vpop.permute.xlu0 %2580
        %2582 = vset.pattern.permute.xlu0 0
        %2583 = vperm.xlu0 %2582, %v2568
        %v2584 = vpop.permute.xlu0 %2583
        %2585 = vset.pattern.permute.xlu0 0
        %2586 = vperm.xlu0 %2585, %v2569
        %v2587 = vpop.permute.xlu0 %2586
        %2588 = vset.pattern.permute.xlu0 0
        %2589 = vperm.xlu0 %2588, %v2570
        %v2590 = vpop.permute.xlu0 %2589
        %2591 = vset.pattern.permute.xlu0 0
        %2592 = vperm.xlu0 %2591, %v2571
        %v2593 = vpop.permute.xlu0 %2592
        %2594 = vset.pattern.permute.xlu0 0
        %2595 = vperm.xlu0 %2594, %v2572
        %v2596 = vpop.permute.xlu0 %2595
        %v2597 = vlaneseq
        %v2598 = vshrl.u32 %v2597, 7
        %v2599 = vsub.s32 %v1318, %v2598
        %v2600 = vrot.slane %v2575, %v2599
        %v2601 = vlaneseq
        %v2602 = vshrl.u32 %v2601, 7
        %v2603 = vsub.s32 %v1318, %v2602
        %v2604 = vrot.slane %v2578, %v2603
        %v2605 = vlaneseq
        %v2606 = vshrl.u32 %v2605, 7
        %v2607 = vsub.s32 %v1318, %v2606
        %v2608 = vrot.slane %v2581, %v2607
        %v2609 = vlaneseq
        %v2610 = vshrl.u32 %v2609, 7
        %v2611 = vsub.s32 %v1318, %v2610
        %v2612 = vrot.slane %v2584, %v2611
        %v2613 = vlaneseq
        %v2614 = vshrl.u32 %v2613, 7
        %v2615 = vsub.s32 %v1318, %v2614
        %v2616 = vrot.slane %v2587, %v2615
        %v2617 = vlaneseq
        %v2618 = vshrl.u32 %v2617, 7
        %v2619 = vsub.s32 %v1318, %v2618
        %v2620 = vrot.slane %v2590, %v2619
        %v2621 = vlaneseq
        %v2622 = vshrl.u32 %v2621, 7
        %v2623 = vsub.s32 %v1318, %v2622
        %v2624 = vrot.slane %v2593, %v2623
        %v2625 = vlaneseq
        %v2626 = vshrl.u32 %v2625, 7
        %v2627 = vsub.s32 %v1318, %v2626
        %v2628 = vrot.slane %v2596, %v2627
        %v2629 = vsel %vm1383, %v2604, %v2600
        %v2630 = vsel %vm1385, %v2608, %v2629
        %v2631 = vsel %vm1387, %v2612, %v2630
        %v2632 = vsel %vm1389, %v2616, %v2631
        %v2633 = vsel %vm1391, %v2620, %v2632
        %v2634 = vsel %vm1393, %v2624, %v2633
        %v2635 = vsel %vm1395, %v2628, %v2634
        %v2636 = vpack.c.b16 %v2635, %v2635
        %v2638 = vsel %vm1406, %v2636, 0
        %vm2640 = vcmask 1043456
        %v2642 = vsel %vm2640, %v2555, 0
        %2644 = vmatprep.subr.bf16.mxu0 0
        %2645 = vmatpush1.bf16.msra.mxu0 %v2642
        %2646 = vmatprep.subr.bf16.mxu0 0
        %2647 = vmatpush1.bf16.msra.mxu0 0
        %2648 = vmatprep.subr.bf16.mxu0 0
        %2649 = vmatpush1.bf16.msra.mxu0 0
        %2650 = vmatprep.subr.bf16.mxu0 0
        %2651 = vmatpush1.bf16.msra.mxu0 0
        %2652 = vmatprep.subr.bf16.mxu0 0
        %2653 = vmatpush1.bf16.msra.mxu0 0
        %2654 = vmatprep.subr.bf16.mxu0 0
        %2655 = vmatpush1.bf16.msra.mxu0 0
        %2656 = vmatprep.subr.bf16.mxu0 0
        %2657 = vmatpush1.bf16.msra.mxu0 0
        %2658 = vmatprep.subr.bf16.mxu0 0
        %2659 = vmatpush1.bf16.msra.mxu0 0
        %2660 = vmatprep.subr.bf16.mxu0 0
        %2661 = vmatpush1.bf16.msra.mxu0 0
        %2662 = vmatprep.subr.bf16.mxu0 0
        %2663 = vmatpush1.bf16.msra.mxu0 0
        %2664 = vmatprep.subr.bf16.mxu0 0
        %2665 = vmatpush1.bf16.msra.mxu0 0
        %2666 = vmatprep.subr.bf16.mxu0 0
        %2667 = vmatpush1.bf16.msra.mxu0 0
        %2668 = vmatprep.subr.bf16.mxu0 0
        %2669 = vmatpush1.bf16.msra.mxu0 0
        %2670 = vmatprep.subr.bf16.mxu0 0
        %2671 = vmatpush1.bf16.msra.mxu0 0
        %2672 = vmatprep.subr.bf16.mxu0 0
        %2673 = vmatpush1.bf16.msra.mxu0 0
        %2674 = vmatprep.subr.bf16.mxu0 0
        %2675 = vmatpush1.bf16.msra.mxu0 0
        %2676 = vmatprep.mubr.bf16.mxu0 0
        %2677 = vmatmul.mubr.bf16.gmra.mrb[0].mxu0 %v2638
        %v2678 = vpop.f32.mrb[0].mxu0
        %v2679 = vadd.f32 0.0, %v2678
        %v2680 = vpop.f32.mrb[0].mxu0
        %v2681 = vpop.f32.mrb[0].mxu0
        %v2682 = vpop.f32.mrb[0].mxu0
        %2683 = vdwg.mxu0
        %v2692 = vunpack.c.l.b16 %v2547
        %v2693 = vunpack.c.l.b16 %v2548
        %v2694 = vunpack.c.l.b16 %v2549
        %v2695 = vunpack.c.l.b16 %v2550
        %v2696 = vunpack.c.l.b16 %v2551
        %v2697 = vunpack.c.l.b16 %v2552
        %v2698 = vunpack.c.l.b16 %v2553
        %v2699 = vunpack.c.l.b16 %v2554
        %2700 = vset.pattern.permute.xlu0 0
        %2701 = vperm.xlu0 %2700, %v2692
        %v2702 = vpop.permute.xlu0 %2701
        %2703 = vset.pattern.permute.xlu0 0
        %2704 = vperm.xlu0 %2703, %v2693
        %v2705 = vpop.permute.xlu0 %2704
        %2706 = vset.pattern.permute.xlu0 0
        %2707 = vperm.xlu0 %2706, %v2694
        %v2708 = vpop.permute.xlu0 %2707
        %2709 = vset.pattern.permute.xlu0 0
        %2710 = vperm.xlu0 %2709, %v2695
        %v2711 = vpop.permute.xlu0 %2710
        %2712 = vset.pattern.permute.xlu0 0
        %2713 = vperm.xlu0 %2712, %v2696
        %v2714 = vpop.permute.xlu0 %2713
        %2715 = vset.pattern.permute.xlu0 0
        %2716 = vperm.xlu0 %2715, %v2697
        %v2717 = vpop.permute.xlu0 %2716
        %2718 = vset.pattern.permute.xlu0 0
        %2719 = vperm.xlu0 %2718, %v2698
        %v2720 = vpop.permute.xlu0 %2719
        %2721 = vset.pattern.permute.xlu0 0
        %2722 = vperm.xlu0 %2721, %v2699
        %v2723 = vpop.permute.xlu0 %2722
        %v2724 = vlaneseq
        %v2725 = vshrl.u32 %v2724, 7
        %v2726 = vsub.s32 %v1318, %v2725
        %v2727 = vrot.slane %v2702, %v2726
        %v2728 = vlaneseq
        %v2729 = vshrl.u32 %v2728, 7
        %v2730 = vsub.s32 %v1318, %v2729
        %v2731 = vrot.slane %v2705, %v2730
        %v2732 = vlaneseq
        %v2733 = vshrl.u32 %v2732, 7
        %v2734 = vsub.s32 %v1318, %v2733
        %v2735 = vrot.slane %v2708, %v2734
        %v2736 = vlaneseq
        %v2737 = vshrl.u32 %v2736, 7
        %v2738 = vsub.s32 %v1318, %v2737
        %v2739 = vrot.slane %v2711, %v2738
        %v2740 = vlaneseq
        %v2741 = vshrl.u32 %v2740, 7
        %v2742 = vsub.s32 %v1318, %v2741
        %v2743 = vrot.slane %v2714, %v2742
        %v2744 = vlaneseq
        %v2745 = vshrl.u32 %v2744, 7
        %v2746 = vsub.s32 %v1318, %v2745
        %v2747 = vrot.slane %v2717, %v2746
        %v2748 = vlaneseq
        %v2749 = vshrl.u32 %v2748, 7
        %v2750 = vsub.s32 %v1318, %v2749
        %v2751 = vrot.slane %v2720, %v2750
        %v2752 = vlaneseq
        %v2753 = vshrl.u32 %v2752, 7
        %v2754 = vsub.s32 %v1318, %v2753
        %v2755 = vrot.slane %v2723, %v2754
        %v2756 = vsel %vm1383, %v2731, %v2727
        %v2757 = vsel %vm1385, %v2735, %v2756
        %v2758 = vsel %vm1387, %v2739, %v2757
        %v2759 = vsel %vm1389, %v2743, %v2758
        %v2760 = vsel %vm1391, %v2747, %v2759
        %v2761 = vsel %vm1393, %v2751, %v2760
        %v2762 = vsel %vm1395, %v2755, %v2761
        %v2763 = vpack.c.b16 %v2762, %v2762
        %v2765 = vsel %vm1406, %v2763, 0
        %v2768 = vsel %vm2640, %v2556, 0
        %2770 = vmatprep.subr.bf16.mxu0 0
        %2771 = vmatpush1.bf16.msra.mxu0 %v2768
        %2772 = vmatprep.subr.bf16.mxu0 0
        %2773 = vmatpush1.bf16.msra.mxu0 0
        %2774 = vmatprep.subr.bf16.mxu0 0
        %2775 = vmatpush1.bf16.msra.mxu0 0
        %2776 = vmatprep.subr.bf16.mxu0 0
        %2777 = vmatpush1.bf16.msra.mxu0 0
        %2778 = vmatprep.subr.bf16.mxu0 0
        %2779 = vmatpush1.bf16.msra.mxu0 0
        %2780 = vmatprep.subr.bf16.mxu0 0
        %2781 = vmatpush1.bf16.msra.mxu0 0
        %2782 = vmatprep.subr.bf16.mxu0 0
        %2783 = vmatpush1.bf16.msra.mxu0 0
        %2784 = vmatprep.subr.bf16.mxu0 0
        %2785 = vmatpush1.bf16.msra.mxu0 0
        %2786 = vmatprep.subr.bf16.mxu0 0
        %2787 = vmatpush1.bf16.msra.mxu0 0
        %2788 = vmatprep.subr.bf16.mxu0 0
        %2789 = vmatpush1.bf16.msra.mxu0 0
        %2790 = vmatprep.subr.bf16.mxu0 0
        %2791 = vmatpush1.bf16.msra.mxu0 0
        %2792 = vmatprep.subr.bf16.mxu0 0
        %2793 = vmatpush1.bf16.msra.mxu0 0
        %2794 = vmatprep.subr.bf16.mxu0 0
        %2795 = vmatpush1.bf16.msra.mxu0 0
        %2796 = vmatprep.subr.bf16.mxu0 0
        %2797 = vmatpush1.bf16.msra.mxu0 0
        %2798 = vmatprep.subr.bf16.mxu0 0
        %2799 = vmatpush1.bf16.msra.mxu0 0
        %2800 = vmatprep.subr.bf16.mxu0 0
        %2801 = vmatpush1.bf16.msra.mxu0 0
        %2802 = vmatprep.mubr.bf16.mxu0 0
        %2803 = vmatmul.mubr.bf16.gmra.mrb[0].mxu0 %v2765
        %v2804 = vpop.f32.mrb[0].mxu0
        %v2805 = vadd.f32 0.0, %v2804
        %v2806 = vpop.f32.mrb[0].mxu0
        %v2807 = vpop.f32.mrb[0].mxu0
        %v2808 = vpop.f32.mrb[0].mxu0
        %2809 = vdwg.mxu0
        %v2818 = vunpack.c.l.b16 %v1653
        %v2819 = vunpack.c.l.b16 %v1654
        %v2820 = vunpack.c.l.b16 %v1655
        %v2821 = vunpack.c.l.b16 %v1656
        %v2822 = vunpack.c.l.b16 %v1657
        %v2823 = vunpack.c.l.b16 %v1658
        %v2824 = vunpack.c.l.b16 %v1659
        %v2825 = vunpack.c.l.b16 %v1660
        %2826 = vset.pattern.permute.xlu0 0
        %2827 = vperm.xlu0 %2826, %v2818
        %v2828 = vpop.permute.xlu0 %2827
        %2829 = vset.pattern.permute.xlu0 0
        %2830 = vperm.xlu0 %2829, %v2819
        %v2831 = vpop.permute.xlu0 %2830
        %2832 = vset.pattern.permute.xlu0 0
        %2833 = vperm.xlu0 %2832, %v2820
        %v2834 = vpop.permute.xlu0 %2833
        %2835 = vset.pattern.permute.xlu0 0
        %2836 = vperm.xlu0 %2835, %v2821
        %v2837 = vpop.permute.xlu0 %2836
        %2838 = vset.pattern.permute.xlu0 0
        %2839 = vperm.xlu0 %2838, %v2822
        %v2840 = vpop.permute.xlu0 %2839
        %2841 = vset.pattern.permute.xlu0 0
        %2842 = vperm.xlu0 %2841, %v2823
        %v2843 = vpop.permute.xlu0 %2842
        %2844 = vset.pattern.permute.xlu0 0
        %2845 = vperm.xlu0 %2844, %v2824
        %v2846 = vpop.permute.xlu0 %2845
        %2847 = vset.pattern.permute.xlu0 0
        %2848 = vperm.xlu0 %2847, %v2825
        %v2849 = vpop.permute.xlu0 %2848
        %v2850 = vlaneseq
        %v2851 = vshrl.u32 %v2850, 7
        %v2852 = vsub.s32 %v1318, %v2851
        %v2853 = vrot.slane %v2828, %v2852
        %v2854 = vlaneseq
        %v2855 = vshrl.u32 %v2854, 7
        %v2856 = vsub.s32 %v1318, %v2855
        %v2857 = vrot.slane %v2831, %v2856
        %v2858 = vlaneseq
        %v2859 = vshrl.u32 %v2858, 7
        %v2860 = vsub.s32 %v1318, %v2859
        %v2861 = vrot.slane %v2834, %v2860
        %v2862 = vlaneseq
        %v2863 = vshrl.u32 %v2862, 7
        %v2864 = vsub.s32 %v1318, %v2863
        %v2865 = vrot.slane %v2837, %v2864
        %v2866 = vlaneseq
        %v2867 = vshrl.u32 %v2866, 7
        %v2868 = vsub.s32 %v1318, %v2867
        %v2869 = vrot.slane %v2840, %v2868
        %v2870 = vlaneseq
        %v2871 = vshrl.u32 %v2870, 7
        %v2872 = vsub.s32 %v1318, %v2871
        %v2873 = vrot.slane %v2843, %v2872
        %v2874 = vlaneseq
        %v2875 = vshrl.u32 %v2874, 7
        %v2876 = vsub.s32 %v1318, %v2875
        %v2877 = vrot.slane %v2846, %v2876
        %v2878 = vlaneseq
        %v2879 = vshrl.u32 %v2878, 7
        %v2880 = vsub.s32 %v1318, %v2879
        %v2881 = vrot.slane %v2849, %v2880
        %v2882 = vsel %vm1383, %v2857, %v2853
        %v2883 = vsel %vm1385, %v2861, %v2882
        %v2884 = vsel %vm1387, %v2865, %v2883
        %v2885 = vsel %vm1389, %v2869, %v2884
        %v2886 = vsel %vm1391, %v2873, %v2885
        %v2887 = vsel %vm1393, %v2877, %v2886
        %v2888 = vsel %vm1395, %v2881, %v2887
        %v2889 = vpack.c.b16 %v2888, %v2888
        %v2891 = vsel %vm1406, %v2889, 0
        %v2894 = vsel %vm2640, %v1669, 0
        %2896 = vmatprep.subr.bf16.mxu0 0
        %2897 = vmatpush1.bf16.msra.mxu0 %v2894
        %2898 = vmatprep.subr.bf16.mxu0 0
        %2899 = vmatpush1.bf16.msra.mxu0 0
        %2900 = vmatprep.subr.bf16.mxu0 0
        %2901 = vmatpush1.bf16.msra.mxu0 0
        %2902 = vmatprep.subr.bf16.mxu0 0
        %2903 = vmatpush1.bf16.msra.mxu0 0
        %2904 = vmatprep.subr.bf16.mxu0 0
        %2905 = vmatpush1.bf16.msra.mxu0 0
        %2906 = vmatprep.subr.bf16.mxu0 0
        %2907 = vmatpush1.bf16.msra.mxu0 0
        %2908 = vmatprep.subr.bf16.mxu0 0
        %2909 = vmatpush1.bf16.msra.mxu0 0
        %2910 = vmatprep.subr.bf16.mxu0 0
        %2911 = vmatpush1.bf16.msra.mxu0 0
        %2912 = vmatprep.subr.bf16.mxu0 0
        %2913 = vmatpush1.bf16.msra.mxu0 0
        %2914 = vmatprep.subr.bf16.mxu0 0
        %2915 = vmatpush1.bf16.msra.mxu0 0
        %2916 = vmatprep.subr.bf16.mxu0 0
        %2917 = vmatpush1.bf16.msra.mxu0 0
        %2918 = vmatprep.subr.bf16.mxu0 0
        %2919 = vmatpush1.bf16.msra.mxu0 0
        %2920 = vmatprep.subr.bf16.mxu0 0
        %2921 = vmatpush1.bf16.msra.mxu0 0
        %2922 = vmatprep.subr.bf16.mxu0 0
        %2923 = vmatpush1.bf16.msra.mxu0 0
        %2924 = vmatprep.subr.bf16.mxu0 0
        %2925 = vmatpush1.bf16.msra.mxu0 0
        %2926 = vmatprep.subr.bf16.mxu0 0
        %2927 = vmatpush1.bf16.msra.mxu0 0
        %2928 = vmatprep.mubr.bf16.mxu0 0
        %2929 = vmatmul.mubr.bf16.gmra.mrb[0].mxu0 %v2891
        %v2930 = vpop.f32.mrb[0].mxu0
        %v2931 = vadd.f32 %v2679, %v2930
        %v2932 = vpop.f32.mrb[0].mxu0
        %v2933 = vpop.f32.mrb[0].mxu0
        %v2934 = vpop.f32.mrb[0].mxu0
        %2935 = vdwg.mxu0
        %v2944 = vunpack.c.l.b16 %v1661
        %v2945 = vunpack.c.l.b16 %v1662
        %v2946 = vunpack.c.l.b16 %v1663
        %v2947 = vunpack.c.l.b16 %v1664
        %v2948 = vunpack.c.l.b16 %v1665
        %v2949 = vunpack.c.l.b16 %v1666
        %v2950 = vunpack.c.l.b16 %v1667
        %v2951 = vunpack.c.l.b16 %v1668
        %2952 = vset.pattern.permute.xlu0 0
        %2953 = vperm.xlu0 %2952, %v2944
        %v2954 = vpop.permute.xlu0 %2953
        %2955 = vset.pattern.permute.xlu0 0
        %2956 = vperm.xlu0 %2955, %v2945
        %v2957 = vpop.permute.xlu0 %2956
        %2958 = vset.pattern.permute.xlu0 0
        %2959 = vperm.xlu0 %2958, %v2946
        %v2960 = vpop.permute.xlu0 %2959
        %2961 = vset.pattern.permute.xlu0 0
        %2962 = vperm.xlu0 %2961, %v2947
        %v2963 = vpop.permute.xlu0 %2962
        %2964 = vset.pattern.permute.xlu0 0
        %2965 = vperm.xlu0 %2964, %v2948
        %v2966 = vpop.permute.xlu0 %2965
        %2967 = vset.pattern.permute.xlu0 0
        %2968 = vperm.xlu0 %2967, %v2949
        %v2969 = vpop.permute.xlu0 %2968
        %2970 = vset.pattern.permute.xlu0 0
        %2971 = vperm.xlu0 %2970, %v2950
        %v2972 = vpop.permute.xlu0 %2971
        %2973 = vset.pattern.permute.xlu0 0
        %2974 = vperm.xlu0 %2973, %v2951
        %v2975 = vpop.permute.xlu0 %2974
        %v2976 = vlaneseq
        %v2977 = vshrl.u32 %v2976, 7
        %v2978 = vsub.s32 %v1318, %v2977
        %v2979 = vrot.slane %v2954, %v2978
        %v2980 = vlaneseq
        %v2981 = vshrl.u32 %v2980, 7
        %v2982 = vsub.s32 %v1318, %v2981
        %v2983 = vrot.slane %v2957, %v2982
        %v2984 = vlaneseq
        %v2985 = vshrl.u32 %v2984, 7
        %v2986 = vsub.s32 %v1318, %v2985
        %v2987 = vrot.slane %v2960, %v2986
        %v2988 = vlaneseq
        %v2989 = vshrl.u32 %v2988, 7
        %v2990 = vsub.s32 %v1318, %v2989
        %v2991 = vrot.slane %v2963, %v2990
        %v2992 = vlaneseq
        %v2993 = vshrl.u32 %v2992, 7
        %v2994 = vsub.s32 %v1318, %v2993
        %v2995 = vrot.slane %v2966, %v2994
        %v2996 = vlaneseq
        %v2997 = vshrl.u32 %v2996, 7
        %v2998 = vsub.s32 %v1318, %v2997
        %v2999 = vrot.slane %v2969, %v2998
        %v3000 = vlaneseq
        %v3001 = vshrl.u32 %v3000, 7
        %v3002 = vsub.s32 %v1318, %v3001
        %v3003 = vrot.slane %v2972, %v3002
        %v3004 = vlaneseq
        %v3005 = vshrl.u32 %v3004, 7
        %v3006 = vsub.s32 %v1318, %v3005
        %v3007 = vrot.slane %v2975, %v3006
        %v3008 = vsel %vm1383, %v2983, %v2979
        %v3009 = vsel %vm1385, %v2987, %v3008
        %v3010 = vsel %vm1387, %v2991, %v3009
        %v3011 = vsel %vm1389, %v2995, %v3010
        %v3012 = vsel %vm1391, %v2999, %v3011
        %v3013 = vsel %vm1393, %v3003, %v3012
        %v3014 = vsel %vm1395, %v3007, %v3013
        %v3015 = vpack.c.b16 %v3014, %v3014
        %v3017 = vsel %vm1406, %v3015, 0
        %v3020 = vsel %vm2640, %v1670, 0
        %3022 = vmatprep.subr.bf16.mxu0 0
        %3023 = vmatpush1.bf16.msra.mxu0 %v3020
        %3024 = vmatprep.subr.bf16.mxu0 0
        %3025 = vmatpush1.bf16.msra.mxu0 0
        %3026 = vmatprep.subr.bf16.mxu0 0
        %3027 = vmatpush1.bf16.msra.mxu0 0
        %3028 = vmatprep.subr.bf16.mxu0 0
        %3029 = vmatpush1.bf16.msra.mxu0 0
        %3030 = vmatprep.subr.bf16.mxu0 0
        %3031 = vmatpush1.bf16.msra.mxu0 0
        %3032 = vmatprep.subr.bf16.mxu0 0
        %3033 = vmatpush1.bf16.msra.mxu0 0
        %3034 = vmatprep.subr.bf16.mxu0 0
        %3035 = vmatpush1.bf16.msra.mxu0 0
        %3036 = vmatprep.subr.bf16.mxu0 0
        %3037 = vmatpush1.bf16.msra.mxu0 0
        %3038 = vmatprep.subr.bf16.mxu0 0
        %3039 = vmatpush1.bf16.msra.mxu0 0
        %3040 = vmatprep.subr.bf16.mxu0 0
        %3041 = vmatpush1.bf16.msra.mxu0 0
        %3042 = vmatprep.subr.bf16.mxu0 0
        %3043 = vmatpush1.bf16.msra.mxu0 0
        %3044 = vmatprep.subr.bf16.mxu0 0
        %3045 = vmatpush1.bf16.msra.mxu0 0
        %3046 = vmatprep.subr.bf16.mxu0 0
        %3047 = vmatpush1.bf16.msra.mxu0 0
        %3048 = vmatprep.subr.bf16.mxu0 0
        %3049 = vmatpush1.bf16.msra.mxu0 0
        %3050 = vmatprep.subr.bf16.mxu0 0
        %3051 = vmatpush1.bf16.msra.mxu0 0
        %3052 = vmatprep.subr.bf16.mxu0 0
        %3053 = vmatpush1.bf16.msra.mxu0 0
        %3054 = vmatprep.mubr.bf16.mxu0 0
        %3055 = vmatmul.mubr.bf16.gmra.mrb[0].mxu0 %v3017
        %v3056 = vpop.f32.mrb[0].mxu0
        %v3057 = vadd.f32 %v2805, %v3056
        %v3058 = vpop.f32.mrb[0].mxu0
        %v3059 = vpop.f32.mrb[0].mxu0
        %v3060 = vpop.f32.mrb[0].mxu0
        %3061 = vdwg.mxu0
        %v3062 = vmax.f32 %v2931, 0.0
        %v3063 = vmax.f32 %v3057, 0.0
        %3064 = vst [vmem:[#allocation7] sm:$0xff] %v3062
        %3065 = vst [vmem:[#allocation7 + $0x8] sm:$0xff] %v3063
        // Predicated region
        $region57: #{rgat_forward.1} parent=43 // pred_check
          %p3066 = pneg %p176
        $region58: #{rgat_forward.1} parent=43 // pred_check_branch
          %3068 = sbr.rel (%p3066) target = $region60
        $region59: #{rgat_forward.1} parent=43 // pred_region
          %s3070 = ssub.s32 256, 256
          %3071 = vsyncadd [#allocation4], %s3070
          %s3072 = sshll.u32 [#allocation7], 4
          %s3073 = int_to_ptr.vmem [resolvable:$true] %s3072
          %3078 = dma.vmem_to_hbm [thread:$0]  %s3073, 256, %s6, [#allocation4], 128, 128, 8
        $region60: #{rgat_forward.1} parent=43 // pred_fallthru
          _
        // Predicated region
        $region61: #{rgat_forward.1} parent=43 // pred_check
          %p3079 = pneg %p176
        $region62: #{rgat_forward.1} parent=43 // pred_check_branch
          %3081 = sbr.rel (%p3079) target = $region64
        $region63: #{rgat_forward.1} parent=43 // pred_region
          %3082 = dma.done [#allocation4], 256
        $region64: #{rgat_forward.1} parent=43 // pred_fallthru
          _
      $region44: #{rgat_forward.1} parent=5 // pred_fallthru
        _
      %p3083 = scmp.le.s32.totalorder 2, %s17
      // Predicated region
      $region65: #{rgat_forward.1} parent=5 // pred_check
        %p3084 = pneg %p3083
      $region66: #{rgat_forward.1} parent=5 // pred_check_branch
        %3086 = sbr.rel (%p3084) target = $region68
      $region67: #{rgat_forward.1} parent=5 // pred_region
        %s3087 = ssub.s32 %s17, 2
      $region68: #{rgat_forward.1} parent=5 // pred_fallthru
        _
    $region6: #{rgat_forward.1} parent=1 // loop_footer
      %s21 = sadd.s32 1, %s17
    $region7: #{rgat_forward.1} parent=1 // loop_footer_branch
      %16 = sbr.rel target = $region3
    $region8: #{rgat_forward.1} parent=1 // loop_exit
      _
    %3088 = vsyncpa [#allocation3], 1
    %s3089 = scalar_lea.sflag [#allocation3], 1
    %3090 = vsyncpa %s3089, 1
    %3091 = vsyncpa [#allocation4], 1
    %s3092 = scalar_lea.sflag [#allocation4], 1
    %3093 = vsyncpa %s3092, 1
    %3094 = vsyncpa [#allocation5], 1
    %s3095 = scalar_lea.sflag [#allocation5], 1
    %3096 = vsyncpa %s3095, 1

</llo_original>
